<compile_context>
chip_gen: v7x
topology: tpu7x:2x2x1
jax: 0.10.0
libtpu: 0.0.40
codegen_flags: <defaults>
</compile_context>

<pallas_src>
import functools

import jax
import jax.numpy as jnp
import numpy as np
from jax.experimental import pallas as pl
from jax.experimental.pallas import tpu as pltpu


def _round_up(x: int, m: int) -> int:
    return ((x + m - 1) // m) * m


def _make_rnn_kernel(num_layers: int, seq_len: int, hidden_size: int,
                     eps: float = 1e-5, matmul_dtype=jnp.float32):
    """Fused kernel: stacked tanh-RNN over time + LayerNorm + Linear head.

    Ref layout (per grid step over batch tiles):
      x_ref:                 (T, TB, D_pad)   time-major input tile
      per layer:             w_ih_t (Din_pad, H_pad), w_hh_t (H_pad, H_pad), bias (1, H_pad)
      ln_w, ln_b:            (1, H_pad)
      fc_w_t:                (H_pad, O_pad)
      fc_b:                  (1, O_pad)
      out_ref:               (TB, O_pad)
      scratch: gates_ref (T, TB, H_pad)  [+ seq_ref (T, TB, H_pad) if num_layers > 1]
    """

    def kernel(x_ref, *refs):
        layer_refs = refs[: 3 * num_layers]
        tail = refs[3 * num_layers:]
        ln_w_ref, ln_b_ref, fc_w_ref, fc_b_ref, out_ref = tail[:5]
        gates_ref = tail[5]
        seq_ref = tail[6] if num_layers > 1 else None

        T = seq_len
        TB = out_ref.shape[0]
        H = gates_ref.shape[-1]  # padded hidden

        h = None
        for layer in range(num_layers):
            w_ih = layer_refs[3 * layer][...].astype(matmul_dtype)       # (Din_pad, H_pad)
            w_hh = layer_refs[3 * layer + 1][...].astype(matmul_dtype)   # (H_pad, H_pad)
            bias = layer_refs[3 * layer + 2][...]                        # (1, H_pad)

            # Layer input sequence: x for layer 0, previous layer's outputs otherwise.
            inp = x_ref[...] if layer == 0 else seq_ref[...]
            d_in = inp.shape[-1]
            inp_flat = inp.reshape(T * TB, d_in).astype(matmul_dtype)

            # Hoisted input projection: ONE big MXU matmul per layer (incl. folded biases).
            gates = jnp.dot(inp_flat, w_ih, preferred_element_type=jnp.float32) + bias
            gates_ref[...] = gates.reshape(T, TB, H)

            is_last = layer == num_layers - 1

            def step(t, h_carry, w_hh=w_hh, is_last=is_last):
                # Only the recurrent matmul + tanh are on the serial critical path.
                h_new = jnp.tanh(
                    gates_ref[t]
                    + jnp.dot(h_carry.astype(matmul_dtype), w_hh,
                              preferred_element_type=jnp.float32)
                )
                if not is_last:
                    seq_ref[t] = h_new  # plain VMEM store, not a loop-carried tensor
                return h_new

            h0 = jnp.zeros((TB, H), jnp.float32)
            h = jax.lax.fori_loop(0, T, step, h0, unroll=True)

        # Epilogue operates directly on the top layer's last hidden state (already in h).
        last = h  # (TB, H_pad); padded lanes are exactly zero by construction.
        lane_ids = jax.lax.broadcasted_iota(jnp.int32, (TB, H), 1)
        mask = (lane_ids < hidden_size).astype(jnp.float32)
        inv_h = 1.0 / float(hidden_size)

        mean = jnp.sum(last, axis=-1, keepdims=True) * inv_h       # pads contribute 0
        diff = (last - mean) * mask
        var = jnp.sum(diff * diff, axis=-1, keepdims=True) * inv_h
        normed = diff * jax.lax.rsqrt(var + eps)
        normed = normed * ln_w_ref[...] + ln_b_ref[...]

        out = jnp.dot(normed.astype(matmul_dtype),
                      fc_w_ref[...].astype(matmul_dtype),
                      preferred_element_type=jnp.float32) + fc_b_ref[...]
        out_ref[...] = out.astype(out_ref.dtype)

    return kernel


def rnn_forward_pallas(x, params, *, hidden_size, num_layers, output_size,
                       batch_tile=8, eps=1e-5, matmul_dtype=jnp.float32):
    """x: (B, T, input_size) float32. params: dict of weights (see init_params).

    Host-side layout plumbing: pad all lane dims to 128, time-major input, pre-transpose
    weights, fold biases. Returns (B, output_size) float32.
    """
    LANE = 128
    B, T, D = x.shape
    H_pad = _round_up(hidden_size, LANE)
    O_pad = _round_up(output_size, LANE)
    D_pad = _round_up(D, LANE)
    TB = _round_up(batch_tile, 8)
    B_pad = _round_up(max(B, TB), TB)
    n_batch_tiles = B_pad // TB

    # Pad + transpose input to time-major (T, B_pad, D_pad).
    xp = jnp.zeros((B_pad, T, D_pad), jnp.float32).at[:B, :, :D].set(x.astype(jnp.float32))
    xp = jnp.transpose(xp, (1, 0, 2))

    def const_spec(shape):
        return pl.BlockSpec(shape, lambda b, _n=len(shape): (0,) * _n)

    flat_inputs = [xp]
    in_specs = [pl.BlockSpec((T, TB, D_pad), lambda b: (0, b, 0))]

    for (w_ih, w_hh, b_ih, b_hh) in params["layers"]:
        d_in = w_ih.shape[1]
        d_in_pad = _round_up(d_in, LANE)
        w_ih_t = jnp.zeros((d_in_pad, H_pad), jnp.float32).at[:d_in, :hidden_size].set(w_ih.T)
        w_hh_t = jnp.zeros((H_pad, H_pad), jnp.float32).at[:hidden_size, :hidden_size].set(w_hh.T)
        bias = jnp.zeros((1, H_pad), jnp.float32).at[:, :hidden_size].set(
            (b_ih + b_hh).reshape(1, hidden_size))
        flat_inputs += [w_ih_t, w_hh_t, bias]
        in_specs += [const_spec((d_in_pad, H_pad)),
                     const_spec((H_pad, H_pad)),
                     const_spec((1, H_pad))]

    ln_w = jnp.zeros((1, H_pad), jnp.float32).at[:, :hidden_size].set(
        params["ln_w"].reshape(1, hidden_size))
    ln_b = jnp.zeros((1, H_pad), jnp.float32).at[:, :hidden_size].set(
        params["ln_b"].reshape(1, hidden_size))
    fc_w_t = jnp.zeros((H_pad, O_pad), jnp.float32).at[:hidden_size, :output_size].set(
        params["fc_w"].T)
    fc_b = jnp.zeros((1, O_pad), jnp.float32).at[:, :output_size].set(
        params["fc_b"].reshape(1, output_size))
    flat_inputs += [ln_w, ln_b, fc_w_t, fc_b]
    in_specs += [const_spec((1, H_pad)), const_spec((1, H_pad)),
                 const_spec((H_pad, O_pad)), const_spec((1, O_pad))]

    scratch_shapes = [pltpu.VMEM((T, TB, H_pad), jnp.float32)]
    if num_layers > 1:
        scratch_shapes.append(pltpu.VMEM((T, TB, H_pad), jnp.float32))

    # VMEM budget (per batch tile), sized to stay well inside v7x's 64 MiB/TC.
    weight_bytes = sum(int(np.prod(a.shape)) * 4 for a in flat_inputs[1:])
    est = (2 * T * TB * D_pad * 4          # double-buffered input tile
           + 2 * weight_bytes              # weights (conservatively 2x)
           + 2 * TB * O_pad * 4            # output tile
           + len(scratch_shapes) * T * TB * H_pad * 4)
    vmem_limit = int(min(max(est + (4 << 20), 16 << 20), 48 << 20))

    kernel = _make_rnn_kernel(num_layers, T, hidden_size, eps=eps,
                              matmul_dtype=matmul_dtype)

    out = pl.pallas_call(
        kernel,
        out_shape=jax.ShapeDtypeStruct((B_pad, O_pad), jnp.float32),
        grid_spec=pltpu.PrefetchScalarGridSpec(
            num_scalar_prefetch=0,
            grid=(n_batch_tiles,),
            in_specs=in_specs,
            out_specs=pl.BlockSpec((TB, O_pad), lambda b: (b, 0)),
            scratch_shapes=scratch_shapes,
        ),
        compiler_params=pltpu.CompilerParams(
            dimension_semantics=("parallel",),   # batch tiles shard across TCs (v7x)
            vmem_limit_bytes=vmem_limit,
        ),
    )(*flat_inputs)

    return out[:B, :output_size]


def init_params(key, input_size, hidden_size, num_layers, output_size):
    """PyTorch-like uniform(-1/sqrt(H), 1/sqrt(H)) init; weights in PyTorch layout."""
    params = {"layers": []}
    bound = 1.0 / np.sqrt(hidden_size)
    for layer in range(num_layers):
        d_in = input_size if layer == 0 else hidden_size
        key, k1, k2, k3, k4 = jax.random.split(key, 5)
        w_ih = jax.random.uniform(k1, (hidden_size, d_in), jnp.float32, -bound, bound)
        w_hh = jax.random.uniform(k2, (hidden_size, hidden_size), jnp.float32, -bound, bound)
        b_ih = jax.random.uniform(k3, (1, hidden_size), jnp.float32, -bound, bound)
        b_hh = jax.random.uniform(k4, (1, hidden_size), jnp.float32, -bound, bound)
        params["layers"].append((w_ih, w_hh, b_ih, b_hh))

    params["ln_w"] = jnp.ones((1, hidden_size), jnp.float32)
    params["ln_b"] = jnp.zeros((1, hidden_size), jnp.float32)

    key, k5, k6 = jax.random.split(key, 3)
    fc_bound = 1.0 / np.sqrt(hidden_size)
    params["fc_w"] = jax.random.uniform(
        k5, (output_size, hidden_size), jnp.float32, -fc_bound, fc_bound)
    params["fc_b"] = jax.random.uniform(
        k6, (1, output_size), jnp.float32, -fc_bound, fc_bound)
    return params


def rnn_forward_reference(x, params, eps=1e-5):
    """Pure-JAX reference mirroring the PyTorch forward."""
    seq = x
    for (w_ih, w_hh, b_ih, b_hh) in params["layers"]:
        batch, seq_len, _ = seq.shape
        h = jnp.zeros((batch, w_hh.shape[0]), jnp.float32)
        outs = []
        for t in range(seq_len):
            h = jnp.tanh(seq[:, t] @ w_ih.T + b_ih + h @ w_hh.T + b_hh)
            outs.append(h)
        seq = jnp.stack(outs, axis=1)
    last = seq[:, -1, :]
    mean = last.mean(-1, keepdims=True)
    var = ((last - mean) ** 2).mean(-1, keepdims=True)
    normed = (last - mean) / jnp.sqrt(var + eps)
    normed = normed * params["ln_w"] + params["ln_b"]
    return normed @ params["fc_w"].T + params["fc_b"]


if __name__ == "__main__":
    batch = 2
    seq_len = 8
    input_size = 16
    hidden_size = 32
    num_layers = 2
    output_size = 8

    key = jax.random.PRNGKey(0)
    key, kx = jax.random.split(key)
    x = jax.random.normal(kx, (batch, seq_len, input_size), jnp.float32)

    params = init_params(key, input_size, hidden_size, num_layers, output_size)

    # NOTE: pass matmul_dtype=jnp.bfloat16 on v6e/v7x for higher MXU rate + halved weight DMA.
    fwd = jax.jit(
        functools.partial(
            rnn_forward_pallas,
            hidden_size=hidden_size,
            num_layers=num_layers,
            output_size=output_size,
        )
    )
    out = fwd(x, params)
    out = jax.block_until_ready(out)

    ref = rnn_forward_reference(x, params)
    np.testing.assert_allclose(np.asarray(out), np.asarray(ref), rtol=1e-4, atol=1e-4)

    print("KERNEL_OK")
</pallas_src>

<mosaic_0001>
module attributes {stable_mosaic.version = 11 : i64} {
  func.func @kernel(%arg0: i32, %arg1: memref<8x8x128xf32, #tpu.memory_space<vmem>>, %arg2: memref<128x128xf32, #tpu.memory_space<vmem>>, %arg3: memref<128x128xf32, #tpu.memory_space<vmem>>, %arg4: memref<1x128xf32, #tpu.memory_space<vmem>>, %arg5: memref<128x128xf32, #tpu.memory_space<vmem>>, %arg6: memref<128x128xf32, #tpu.memory_space<vmem>>, %arg7: memref<1x128xf32, #tpu.memory_space<vmem>>, %arg8: memref<1x128xf32, #tpu.memory_space<vmem>>, %arg9: memref<1x128xf32, #tpu.memory_space<vmem>>, %arg10: memref<128x128xf32, #tpu.memory_space<vmem>>, %arg11: memref<1x128xf32, #tpu.memory_space<vmem>>, %arg12: memref<8x128xf32, #tpu.memory_space<vmem>>, %arg13: memref<8x8x128xf32, #tpu.memory_space<vmem>>, %arg14: memref<8x8x128xf32, #tpu.memory_space<vmem>>) attributes {dimension_semantics = [#tpu.dimension_semantics<parallel>], iteration_bounds = array<i64: 1>, scalar_prefetch = 0 : i64, scratch_operands = 2 : i64, tpu.core_type = #tpu.core_type<tc>, window_params = [{transform_indices = @transform_0, window_bounds = array<i64: 8, 8, 128>}, {pipeline_mode = #tpu.pipeline_mode<synchronous>, transform_indices = @transform_1, window_bounds = array<i64: 128, 128>}, {pipeline_mode = #tpu.pipeline_mode<synchronous>, transform_indices = @transform_2, window_bounds = array<i64: 128, 128>}, {pipeline_mode = #tpu.pipeline_mode<synchronous>, transform_indices = @transform_3, window_bounds = array<i64: 1, 128>}, {pipeline_mode = #tpu.pipeline_mode<synchronous>, transform_indices = @transform_4, window_bounds = array<i64: 128, 128>}, {pipeline_mode = #tpu.pipeline_mode<synchronous>, transform_indices = @transform_5, window_bounds = array<i64: 128, 128>}, {pipeline_mode = #tpu.pipeline_mode<synchronous>, transform_indices = @transform_6, window_bounds = array<i64: 1, 128>}, {pipeline_mode = #tpu.pipeline_mode<synchronous>, transform_indices = @transform_7, window_bounds = array<i64: 1, 128>}, {pipeline_mode = #tpu.pipeline_mode<synchronous>, transform_indices = @transform_8, window_bounds = array<i64: 1, 128>}, {pipeline_mode = #tpu.pipeline_mode<synchronous>, transform_indices = @transform_9, window_bounds = array<i64: 128, 128>}, {pipeline_mode = #tpu.pipeline_mode<synchronous>, transform_indices = @transform_10, window_bounds = array<i64: 1, 128>}, {transform_indices = @transform_11, window_bounds = array<i64: 8, 128>}]} {
    %c0 = arith.constant 0 : index
    %c0_0 = arith.constant 0 : index
    %0 = vector.load %arg2[%c0, %c0_0] : memref<128x128xf32, #tpu.memory_space<vmem>>, vector<128x128xf32>
    %c0_1 = arith.constant 0 : index
    %c0_2 = arith.constant 0 : index
    %1 = vector.load %arg3[%c0_1, %c0_2] : memref<128x128xf32, #tpu.memory_space<vmem>>, vector<128x128xf32>
    %c0_3 = arith.constant 0 : index
    %c0_4 = arith.constant 0 : index
    %2 = vector.load %arg4[%c0_3, %c0_4] : memref<1x128xf32, #tpu.memory_space<vmem>>, vector<1x128xf32>
    %c0_5 = arith.constant 0 : index
    %c0_6 = arith.constant 0 : index
    %c0_7 = arith.constant 0 : index
    %3 = vector.load %arg1[%c0_5, %c0_6, %c0_7] : memref<8x8x128xf32, #tpu.memory_space<vmem>>, vector<8x8x128xf32>
    %4 = vector.shape_cast %3 : vector<8x8x128xf32> to vector<64x128xf32>
    %cst = arith.constant dense<0.000000e+00> : vector<64x128xf32>
    %5 = tpu.matmul %4, %0, %cst {dimension_numbers = #tpu.dot_dimension_numbers<[1], [0], [0], [1], [0, 0, 1, 1], [], []>} : vector<64x128xf32>, vector<128x128xf32>, vector<64x128xf32> -> vector<64x128xf32>
    %6 = vector.broadcast %2 : vector<1x128xf32> to vector<64x128xf32>
    %7 = arith.addf %5, %6 : vector<64x128xf32>
    %8 = vector.shape_cast %7 : vector<64x128xf32> to vector<8x8x128xf32>
    %c0_8 = arith.constant 0 : index
    %c0_9 = arith.constant 0 : index
    %c0_10 = arith.constant 0 : index
    %9 = vector.load %arg13[%c0_8, %c0_9, %c0_10] : memref<8x8x128xf32, #tpu.memory_space<vmem>>, vector<8x8x128xf32>
    tpu.vector_store %arg13[%c0_8, %c0_9, %c0_10], %8 {strides = array<i32>} : memref<8x8x128xf32, #tpu.memory_space<vmem>>, vector<8x8x128xf32>,
    %cst_11 = arith.constant 0.000000e+00 : f32
    %10 = vector.broadcast %cst_11 : f32 to vector<8x128xf32>
    %c0_i32 = arith.constant 0 : i32
    %11 = arith.index_cast %c0_i32 : i32 to index
    %c0_12 = arith.constant 0 : index
    %c0_13 = arith.constant 0 : index
    %12 = vector.load %arg13[%11, %c0_12, %c0_13] : memref<8x8x128xf32, #tpu.memory_space<vmem>>, vector<1x8x128xf32>
    %13 = vector.shape_cast %12 : vector<1x8x128xf32> to vector<8x128xf32>
    %cst_14 = arith.constant dense<0.000000e+00> : vector<8x128xf32>
    %14 = tpu.matmul %10, %1, %cst_14 {dimension_numbers = #tpu.dot_dimension_numbers<[1], [0], [0], [1], [0, 0, 1, 1], [], []>} : vector<8x128xf32>, vector<128x128xf32>, vector<8x128xf32> -> vector<8x128xf32>
    %15 = arith.addf %13, %14 : vector<8x128xf32>
    %16 = math.tanh %15 : vector<8x128xf32>
    %17 = arith.index_cast %c0_i32 : i32 to index
    %c0_15 = arith.constant 0 : index
    %c0_16 = arith.constant 0 : index
    %18 = vector.load %arg14[%17, %c0_15, %c0_16] : memref<8x8x128xf32, #tpu.memory_space<vmem>>, vector<1x8x128xf32>
    %19 = vector.shape_cast %18 : vector<1x8x128xf32> to vector<8x128xf32>
    %20 = vector.shape_cast %16 : vector<8x128xf32> to vector<1x8x128xf32>
    tpu.vector_store %arg14[%17, %c0_15, %c0_16], %20 {strides = array<i32>} : memref<8x8x128xf32, #tpu.memory_space<vmem>>, vector<1x8x128xf32>,
    %c1_i32 = arith.constant 1 : i32
    %21 = arith.index_cast %c1_i32 : i32 to index
    %c0_17 = arith.constant 0 : index
    %c0_18 = arith.constant 0 : index
    %22 = vector.load %arg13[%21, %c0_17, %c0_18] : memref<8x8x128xf32, #tpu.memory_space<vmem>>, vector<1x8x128xf32>
    %23 = vector.shape_cast %22 : vector<1x8x128xf32> to vector<8x128xf32>
    %cst_19 = arith.constant dense<0.000000e+00> : vector<8x128xf32>
    %24 = tpu.matmul %16, %1, %cst_19 {dimension_numbers = #tpu.dot_dimension_numbers<[1], [0], [0], [1], [0, 0, 1, 1], [], []>} : vector<8x128xf32>, vector<128x128xf32>, vector<8x128xf32> -> vector<8x128xf32>
    %25 = arith.addf %23, %24 : vector<8x128xf32>
    %26 = math.tanh %25 : vector<8x128xf32>
    %27 = arith.index_cast %c1_i32 : i32 to index
    %c0_20 = arith.constant 0 : index
    %c0_21 = arith.constant 0 : index
    %28 = vector.load %arg14[%27, %c0_20, %c0_21] : memref<8x8x128xf32, #tpu.memory_space<vmem>>, vector<1x8x128xf32>
    %29 = vector.shape_cast %28 : vector<1x8x128xf32> to vector<8x128xf32>
    %30 = vector.shape_cast %26 : vector<8x128xf32> to vector<1x8x128xf32>
    tpu.vector_store %arg14[%27, %c0_20, %c0_21], %30 {strides = array<i32>} : memref<8x8x128xf32, #tpu.memory_space<vmem>>, vector<1x8x128xf32>,
    %c2_i32 = arith.constant 2 : i32
    %31 = arith.index_cast %c2_i32 : i32 to index
    %c0_22 = arith.constant 0 : index
    %c0_23 = arith.constant 0 : index
    %32 = vector.load %arg13[%31, %c0_22, %c0_23] : memref<8x8x128xf32, #tpu.memory_space<vmem>>, vector<1x8x128xf32>
    %33 = vector.shape_cast %32 : vector<1x8x128xf32> to vector<8x128xf32>
    %cst_24 = arith.constant dense<0.000000e+00> : vector<8x128xf32>
    %34 = tpu.matmul %26, %1, %cst_24 {dimension_numbers = #tpu.dot_dimension_numbers<[1], [0], [0], [1], [0, 0, 1, 1], [], []>} : vector<8x128xf32>, vector<128x128xf32>, vector<8x128xf32> -> vector<8x128xf32>
    %35 = arith.addf %33, %34 : vector<8x128xf32>
    %36 = math.tanh %35 : vector<8x128xf32>
    %37 = arith.index_cast %c2_i32 : i32 to index
    %c0_25 = arith.constant 0 : index
    %c0_26 = arith.constant 0 : index
    %38 = vector.load %arg14[%37, %c0_25, %c0_26] : memref<8x8x128xf32, #tpu.memory_space<vmem>>, vector<1x8x128xf32>
    %39 = vector.shape_cast %38 : vector<1x8x128xf32> to vector<8x128xf32>
    %40 = vector.shape_cast %36 : vector<8x128xf32> to vector<1x8x128xf32>
    tpu.vector_store %arg14[%37, %c0_25, %c0_26], %40 {strides = array<i32>} : memref<8x8x128xf32, #tpu.memory_space<vmem>>, vector<1x8x128xf32>,
    %c3_i32 = arith.constant 3 : i32
    %41 = arith.index_cast %c3_i32 : i32 to index
    %c0_27 = arith.constant 0 : index
    %c0_28 = arith.constant 0 : index
    %42 = vector.load %arg13[%41, %c0_27, %c0_28] : memref<8x8x128xf32, #tpu.memory_space<vmem>>, vector<1x8x128xf32>
    %43 = vector.shape_cast %42 : vector<1x8x128xf32> to vector<8x128xf32>
    %cst_29 = arith.constant dense<0.000000e+00> : vector<8x128xf32>
    %44 = tpu.matmul %36, %1, %cst_29 {dimension_numbers = #tpu.dot_dimension_numbers<[1], [0], [0], [1], [0, 0, 1, 1], [], []>} : vector<8x128xf32>, vector<128x128xf32>, vector<8x128xf32> -> vector<8x128xf32>
    %45 = arith.addf %43, %44 : vector<8x128xf32>
    %46 = math.tanh %45 : vector<8x128xf32>
    %47 = arith.index_cast %c3_i32 : i32 to index
    %c0_30 = arith.constant 0 : index
    %c0_31 = arith.constant 0 : index
    %48 = vector.load %arg14[%47, %c0_30, %c0_31] : memref<8x8x128xf32, #tpu.memory_space<vmem>>, vector<1x8x128xf32>
    %49 = vector.shape_cast %48 : vector<1x8x128xf32> to vector<8x128xf32>
    %50 = vector.shape_cast %46 : vector<8x128xf32> to vector<1x8x128xf32>
    tpu.vector_store %arg14[%47, %c0_30, %c0_31], %50 {strides = array<i32>} : memref<8x8x128xf32, #tpu.memory_space<vmem>>, vector<1x8x128xf32>,
    %c4_i32 = arith.constant 4 : i32
    %51 = arith.index_cast %c4_i32 : i32 to index
    %c0_32 = arith.constant 0 : index
    %c0_33 = arith.constant 0 : index
    %52 = vector.load %arg13[%51, %c0_32, %c0_33] : memref<8x8x128xf32, #tpu.memory_space<vmem>>, vector<1x8x128xf32>
    %53 = vector.shape_cast %52 : vector<1x8x128xf32> to vector<8x128xf32>
    %cst_34 = arith.constant dense<0.000000e+00> : vector<8x128xf32>
    %54 = tpu.matmul %46, %1, %cst_34 {dimension_numbers = #tpu.dot_dimension_numbers<[1], [0], [0], [1], [0, 0, 1, 1], [], []>} : vector<8x128xf32>, vector<128x128xf32>, vector<8x128xf32> -> vector<8x128xf32>
    %55 = arith.addf %53, %54 : vector<8x128xf32>
    %56 = math.tanh %55 : vector<8x128xf32>
    %57 = arith.index_cast %c4_i32 : i32 to index
    %c0_35 = arith.constant 0 : index
    %c0_36 = arith.constant 0 : index
    %58 = vector.load %arg14[%57, %c0_35, %c0_36] : memref<8x8x128xf32, #tpu.memory_space<vmem>>, vector<1x8x128xf32>
    %59 = vector.shape_cast %58 : vector<1x8x128xf32> to vector<8x128xf32>
    %60 = vector.shape_cast %56 : vector<8x128xf32> to vector<1x8x128xf32>
    tpu.vector_store %arg14[%57, %c0_35, %c0_36], %60 {strides = array<i32>} : memref<8x8x128xf32, #tpu.memory_space<vmem>>, vector<1x8x128xf32>,
    %c5_i32 = arith.constant 5 : i32
    %61 = arith.index_cast %c5_i32 : i32 to index
    %c0_37 = arith.constant 0 : index
    %c0_38 = arith.constant 0 : index
    %62 = vector.load %arg13[%61, %c0_37, %c0_38] : memref<8x8x128xf32, #tpu.memory_space<vmem>>, vector<1x8x128xf32>
    %63 = vector.shape_cast %62 : vector<1x8x128xf32> to vector<8x128xf32>
    %cst_39 = arith.constant dense<0.000000e+00> : vector<8x128xf32>
    %64 = tpu.matmul %56, %1, %cst_39 {dimension_numbers = #tpu.dot_dimension_numbers<[1], [0], [0], [1], [0, 0, 1, 1], [], []>} : vector<8x128xf32>, vector<128x128xf32>, vector<8x128xf32> -> vector<8x128xf32>
    %65 = arith.addf %63, %64 : vector<8x128xf32>
    %66 = math.tanh %65 : vector<8x128xf32>
    %67 = arith.index_cast %c5_i32 : i32 to index
    %c0_40 = arith.constant 0 : index
    %c0_41 = arith.constant 0 : index
    %68 = vector.load %arg14[%67, %c0_40, %c0_41] : memref<8x8x128xf32, #tpu.memory_space<vmem>>, vector<1x8x128xf32>
    %69 = vector.shape_cast %68 : vector<1x8x128xf32> to vector<8x128xf32>
    %70 = vector.shape_cast %66 : vector<8x128xf32> to vector<1x8x128xf32>
    tpu.vector_store %arg14[%67, %c0_40, %c0_41], %70 {strides = array<i32>} : memref<8x8x128xf32, #tpu.memory_space<vmem>>, vector<1x8x128xf32>,
    %c6_i32 = arith.constant 6 : i32
    %71 = arith.index_cast %c6_i32 : i32 to index
    %c0_42 = arith.constant 0 : index
    %c0_43 = arith.constant 0 : index
    %72 = vector.load %arg13[%71, %c0_42, %c0_43] : memref<8x8x128xf32, #tpu.memory_space<vmem>>, vector<1x8x128xf32>
    %73 = vector.shape_cast %72 : vector<1x8x128xf32> to vector<8x128xf32>
    %cst_44 = arith.constant dense<0.000000e+00> : vector<8x128xf32>
    %74 = tpu.matmul %66, %1, %cst_44 {dimension_numbers = #tpu.dot_dimension_numbers<[1], [0], [0], [1], [0, 0, 1, 1], [], []>} : vector<8x128xf32>, vector<128x128xf32>, vector<8x128xf32> -> vector<8x128xf32>
    %75 = arith.addf %73, %74 : vector<8x128xf32>
    %76 = math.tanh %75 : vector<8x128xf32>
    %77 = arith.index_cast %c6_i32 : i32 to index
    %c0_45 = arith.constant 0 : index
    %c0_46 = arith.constant 0 : index
    %78 = vector.load %arg14[%77, %c0_45, %c0_46] : memref<8x8x128xf32, #tpu.memory_space<vmem>>, vector<1x8x128xf32>
    %79 = vector.shape_cast %78 : vector<1x8x128xf32> to vector<8x128xf32>
    %80 = vector.shape_cast %76 : vector<8x128xf32> to vector<1x8x128xf32>
    tpu.vector_store %arg14[%77, %c0_45, %c0_46], %80 {strides = array<i32>} : memref<8x8x128xf32, #tpu.memory_space<vmem>>, vector<1x8x128xf32>,
    %c7_i32 = arith.constant 7 : i32
    %81 = arith.index_cast %c7_i32 : i32 to index
    %c0_47 = arith.constant 0 : index
    %c0_48 = arith.constant 0 : index
    %82 = vector.load %arg13[%81, %c0_47, %c0_48] : memref<8x8x128xf32, #tpu.memory_space<vmem>>, vector<1x8x128xf32>
    %83 = vector.shape_cast %82 : vector<1x8x128xf32> to vector<8x128xf32>
    %cst_49 = arith.constant dense<0.000000e+00> : vector<8x128xf32>
    %84 = tpu.matmul %76, %1, %cst_49 {dimension_numbers = #tpu.dot_dimension_numbers<[1], [0], [0], [1], [0, 0, 1, 1], [], []>} : vector<8x128xf32>, vector<128x128xf32>, vector<8x128xf32> -> vector<8x128xf32>
    %85 = arith.addf %83, %84 : vector<8x128xf32>
    %86 = math.tanh %85 : vector<8x128xf32>
    %87 = arith.index_cast %c7_i32 : i32 to index
    %c0_50 = arith.constant 0 : index
    %c0_51 = arith.constant 0 : index
    %88 = vector.load %arg14[%87, %c0_50, %c0_51] : memref<8x8x128xf32, #tpu.memory_space<vmem>>, vector<1x8x128xf32>
    %89 = vector.shape_cast %88 : vector<1x8x128xf32> to vector<8x128xf32>
    %90 = vector.shape_cast %86 : vector<8x128xf32> to vector<1x8x128xf32>
    tpu.vector_store %arg14[%87, %c0_50, %c0_51], %90 {strides = array<i32>} : memref<8x8x128xf32, #tpu.memory_space<vmem>>, vector<1x8x128xf32>,
    %c8_i32 = arith.constant 8 : i32
    %c0_52 = arith.constant 0 : index
    %c0_53 = arith.constant 0 : index
    %91 = vector.load %arg5[%c0_52, %c0_53] : memref<128x128xf32, #tpu.memory_space<vmem>>, vector<128x128xf32>
    %c0_54 = arith.constant 0 : index
    %c0_55 = arith.constant 0 : index
    %92 = vector.load %arg6[%c0_54, %c0_55] : memref<128x128xf32, #tpu.memory_space<vmem>>, vector<128x128xf32>
    %c0_56 = arith.constant 0 : index
    %c0_57 = arith.constant 0 : index
    %93 = vector.load %arg7[%c0_56, %c0_57] : memref<1x128xf32, #tpu.memory_space<vmem>>, vector<1x128xf32>
    %c0_58 = arith.constant 0 : index
    %c0_59 = arith.constant 0 : index
    %c0_60 = arith.constant 0 : index
    %94 = vector.load %arg14[%c0_58, %c0_59, %c0_60] : memref<8x8x128xf32, #tpu.memory_space<vmem>>, vector<8x8x128xf32>
    %95 = vector.shape_cast %94 : vector<8x8x128xf32> to vector<64x128xf32>
    %cst_61 = arith.constant dense<0.000000e+00> : vector<64x128xf32>
    %96 = tpu.matmul %95, %91, %cst_61 {dimension_numbers = #tpu.dot_dimension_numbers<[1], [0], [0], [1], [0, 0, 1, 1], [], []>} : vector<64x128xf32>, vector<128x128xf32>, vector<64x128xf32> -> vector<64x128xf32>
    %97 = vector.broadcast %93 : vector<1x128xf32> to vector<64x128xf32>
    %98 = arith.addf %96, %97 : vector<64x128xf32>
    %99 = vector.shape_cast %98 : vector<64x128xf32> to vector<8x8x128xf32>
    %c0_62 = arith.constant 0 : index
    %c0_63 = arith.constant 0 : index
    %c0_64 = arith.constant 0 : index
    %100 = vector.load %arg13[%c0_62, %c0_63, %c0_64] : memref<8x8x128xf32, #tpu.memory_space<vmem>>, vector<8x8x128xf32>
    tpu.vector_store %arg13[%c0_62, %c0_63, %c0_64], %99 {strides = array<i32>} : memref<8x8x128xf32, #tpu.memory_space<vmem>>, vector<8x8x128xf32>,
    %cst_65 = arith.constant 0.000000e+00 : f32
    %101 = vector.broadcast %cst_65 : f32 to vector<8x128xf32>
    %c0_i32_66 = arith.constant 0 : i32
    %102 = arith.index_cast %c0_i32_66 : i32 to index
    %c0_67 = arith.constant 0 : index
    %c0_68 = arith.constant 0 : index
    %103 = vector.load %arg13[%102, %c0_67, %c0_68] : memref<8x8x128xf32, #tpu.memory_space<vmem>>, vector<1x8x128xf32>
    %104 = vector.shape_cast %103 : vector<1x8x128xf32> to vector<8x128xf32>
    %cst_69 = arith.constant dense<0.000000e+00> : vector<8x128xf32>
    %105 = tpu.matmul %101, %92, %cst_69 {dimension_numbers = #tpu.dot_dimension_numbers<[1], [0], [0], [1], [0, 0, 1, 1], [], []>} : vector<8x128xf32>, vector<128x128xf32>, vector<8x128xf32> -> vector<8x128xf32>
    %106 = arith.addf %104, %105 : vector<8x128xf32>
    %107 = math.tanh %106 : vector<8x128xf32>
    %c1_i32_70 = arith.constant 1 : i32
    %108 = arith.index_cast %c1_i32_70 : i32 to index
    %c0_71 = arith.constant 0 : index
    %c0_72 = arith.constant 0 : index
    %109 = vector.load %arg13[%108, %c0_71, %c0_72] : memref<8x8x128xf32, #tpu.memory_space<vmem>>, vector<1x8x128xf32>
    %110 = vector.shape_cast %109 : vector<1x8x128xf32> to vector<8x128xf32>
    %cst_73 = arith.constant dense<0.000000e+00> : vector<8x128xf32>
    %111 = tpu.matmul %107, %92, %cst_73 {dimension_numbers = #tpu.dot_dimension_numbers<[1], [0], [0], [1], [0, 0, 1, 1], [], []>} : vector<8x128xf32>, vector<128x128xf32>, vector<8x128xf32> -> vector<8x128xf32>
    %112 = arith.addf %110, %111 : vector<8x128xf32>
    %113 = math.tanh %112 : vector<8x128xf32>
    %c2_i32_74 = arith.constant 2 : i32
    %114 = arith.index_cast %c2_i32_74 : i32 to index
    %c0_75 = arith.constant 0 : index
    %c0_76 = arith.constant 0 : index
    %115 = vector.load %arg13[%114, %c0_75, %c0_76] : memref<8x8x128xf32, #tpu.memory_space<vmem>>, vector<1x8x128xf32>
    %116 = vector.shape_cast %115 : vector<1x8x128xf32> to vector<8x128xf32>
    %cst_77 = arith.constant dense<0.000000e+00> : vector<8x128xf32>
    %117 = tpu.matmul %113, %92, %cst_77 {dimension_numbers = #tpu.dot_dimension_numbers<[1], [0], [0], [1], [0, 0, 1, 1], [], []>} : vector<8x128xf32>, vector<128x128xf32>, vector<8x128xf32> -> vector<8x128xf32>
    %118 = arith.addf %116, %117 : vector<8x128xf32>
    %119 = math.tanh %118 : vector<8x128xf32>
    %c3_i32_78 = arith.constant 3 : i32
    %120 = arith.index_cast %c3_i32_78 : i32 to index
    %c0_79 = arith.constant 0 : index
    %c0_80 = arith.constant 0 : index
    %121 = vector.load %arg13[%120, %c0_79, %c0_80] : memref<8x8x128xf32, #tpu.memory_space<vmem>>, vector<1x8x128xf32>
    %122 = vector.shape_cast %121 : vector<1x8x128xf32> to vector<8x128xf32>
    %cst_81 = arith.constant dense<0.000000e+00> : vector<8x128xf32>
    %123 = tpu.matmul %119, %92, %cst_81 {dimension_numbers = #tpu.dot_dimension_numbers<[1], [0], [0], [1], [0, 0, 1, 1], [], []>} : vector<8x128xf32>, vector<128x128xf32>, vector<8x128xf32> -> vector<8x128xf32>
    %124 = arith.addf %122, %123 : vector<8x128xf32>
    %125 = math.tanh %124 : vector<8x128xf32>
    %c4_i32_82 = arith.constant 4 : i32
    %126 = arith.index_cast %c4_i32_82 : i32 to index
    %c0_83 = arith.constant 0 : index
    %c0_84 = arith.constant 0 : index
    %127 = vector.load %arg13[%126, %c0_83, %c0_84] : memref<8x8x128xf32, #tpu.memory_space<vmem>>, vector<1x8x128xf32>
    %128 = vector.shape_cast %127 : vector<1x8x128xf32> to vector<8x128xf32>
    %cst_85 = arith.constant dense<0.000000e+00> : vector<8x128xf32>
    %129 = tpu.matmul %125, %92, %cst_85 {dimension_numbers = #tpu.dot_dimension_numbers<[1], [0], [0], [1], [0, 0, 1, 1], [], []>} : vector<8x128xf32>, vector<128x128xf32>, vector<8x128xf32> -> vector<8x128xf32>
    %130 = arith.addf %128, %129 : vector<8x128xf32>
    %131 = math.tanh %130 : vector<8x128xf32>
    %c5_i32_86 = arith.constant 5 : i32
    %132 = arith.index_cast %c5_i32_86 : i32 to index
    %c0_87 = arith.constant 0 : index
    %c0_88 = arith.constant 0 : index
    %133 = vector.load %arg13[%132, %c0_87, %c0_88] : memref<8x8x128xf32, #tpu.memory_space<vmem>>, vector<1x8x128xf32>
    %134 = vector.shape_cast %133 : vector<1x8x128xf32> to vector<8x128xf32>
    %cst_89 = arith.constant dense<0.000000e+00> : vector<8x128xf32>
    %135 = tpu.matmul %131, %92, %cst_89 {dimension_numbers = #tpu.dot_dimension_numbers<[1], [0], [0], [1], [0, 0, 1, 1], [], []>} : vector<8x128xf32>, vector<128x128xf32>, vector<8x128xf32> -> vector<8x128xf32>
    %136 = arith.addf %134, %135 : vector<8x128xf32>
    %137 = math.tanh %136 : vector<8x128xf32>
    %c6_i32_90 = arith.constant 6 : i32
    %138 = arith.index_cast %c6_i32_90 : i32 to index
    %c0_91 = arith.constant 0 : index
    %c0_92 = arith.constant 0 : index
    %139 = vector.load %arg13[%138, %c0_91, %c0_92] : memref<8x8x128xf32, #tpu.memory_space<vmem>>, vector<1x8x128xf32>
    %140 = vector.shape_cast %139 : vector<1x8x128xf32> to vector<8x128xf32>
    %cst_93 = arith.constant dense<0.000000e+00> : vector<8x128xf32>
    %141 = tpu.matmul %137, %92, %cst_93 {dimension_numbers = #tpu.dot_dimension_numbers<[1], [0], [0], [1], [0, 0, 1, 1], [], []>} : vector<8x128xf32>, vector<128x128xf32>, vector<8x128xf32> -> vector<8x128xf32>
    %142 = arith.addf %140, %141 : vector<8x128xf32>
    %143 = math.tanh %142 : vector<8x128xf32>
    %c7_i32_94 = arith.constant 7 : i32
    %144 = arith.index_cast %c7_i32_94 : i32 to index
    %c0_95 = arith.constant 0 : index
    %c0_96 = arith.constant 0 : index
    %145 = vector.load %arg13[%144, %c0_95, %c0_96] : memref<8x8x128xf32, #tpu.memory_space<vmem>>, vector<1x8x128xf32>
    %146 = vector.shape_cast %145 : vector<1x8x128xf32> to vector<8x128xf32>
    %cst_97 = arith.constant dense<0.000000e+00> : vector<8x128xf32>
    %147 = tpu.matmul %143, %92, %cst_97 {dimension_numbers = #tpu.dot_dimension_numbers<[1], [0], [0], [1], [0, 0, 1, 1], [], []>} : vector<8x128xf32>, vector<128x128xf32>, vector<8x128xf32> -> vector<8x128xf32>
    %148 = arith.addf %146, %147 : vector<8x128xf32>
    %149 = math.tanh %148 : vector<8x128xf32>
    %c8_i32_98 = arith.constant 8 : i32
    %150 = tpu.iota {dimensions = array<i32: 1>} : vector<8x128xi32>
    %c32_i32 = arith.constant 32 : i32
    %151 = vector.broadcast %c32_i32 : i32 to vector<8x128xi32>
    %152 = arith.cmpi slt, %150, %151 : vector<8x128xi32>
    %153 = arith.extui %152 : vector<8x128xi1> to vector<8x128xi32>
    %154 = arith.sitofp %153 : vector<8x128xi32> to vector<8x128xf32>
    %cst_99 = arith.constant dense<0.000000e+00> : vector<8xf32>
    %155 = vector.multi_reduction <add>, %149, %cst_99 [1] : vector<8x128xf32> to vector<8xf32>
    %156 = vector.shape_cast %155 : vector<8xf32> to vector<8x1xf32>
    %cst_100 = arith.constant 3.125000e-02 : f32
    %157 = vector.broadcast %cst_100 : f32 to vector<8x1xf32>
    %158 = arith.mulf %156, %157 : vector<8x1xf32>
    %159 = vector.broadcast %158 : vector<8x1xf32> to vector<8x128xf32>
    %160 = arith.subf %149, %159 : vector<8x128xf32>
    %161 = arith.mulf %160, %154 : vector<8x128xf32>
    %162 = arith.mulf %161, %161 : vector<8x128xf32>
    %cst_101 = arith.constant dense<0.000000e+00> : vector<8xf32>
    %163 = vector.multi_reduction <add>, %162, %cst_101 [1] : vector<8x128xf32> to vector<8xf32>
    %164 = vector.shape_cast %163 : vector<8xf32> to vector<8x1xf32>
    %cst_102 = arith.constant 3.125000e-02 : f32
    %165 = vector.broadcast %cst_102 : f32 to vector<8x1xf32>
    %166 = arith.mulf %164, %165 : vector<8x1xf32>
    %cst_103 = arith.constant 9.99999974E-6 : f32
    %167 = vector.broadcast %cst_103 : f32 to vector<8x1xf32>
    %168 = arith.addf %166, %167 : vector<8x1xf32>
    %169 = math.rsqrt %168 : vector<8x1xf32>
    %170 = vector.broadcast %169 : vector<8x1xf32> to vector<8x128xf32>
    %171 = arith.mulf %161, %170 : vector<8x128xf32>
    %c0_104 = arith.constant 0 : index
    %c0_105 = arith.constant 0 : index
    %172 = vector.load %arg8[%c0_104, %c0_105] : memref<1x128xf32, #tpu.memory_space<vmem>>, vector<1x128xf32>
    %173 = vector.broadcast %172 : vector<1x128xf32> to vector<8x128xf32>
    %174 = arith.mulf %171, %173 : vector<8x128xf32>
    %c0_106 = arith.constant 0 : index
    %c0_107 = arith.constant 0 : index
    %175 = vector.load %arg9[%c0_106, %c0_107] : memref<1x128xf32, #tpu.memory_space<vmem>>, vector<1x128xf32>
    %176 = vector.broadcast %175 : vector<1x128xf32> to vector<8x128xf32>
    %177 = arith.addf %174, %176 : vector<8x128xf32>
    %c0_108 = arith.constant 0 : index
    %c0_109 = arith.constant 0 : index
    %178 = vector.load %arg10[%c0_108, %c0_109] : memref<128x128xf32, #tpu.memory_space<vmem>>, vector<128x128xf32>
    %cst_110 = arith.constant dense<0.000000e+00> : vector<8x128xf32>
    %179 = tpu.matmul %177, %178, %cst_110 {dimension_numbers = #tpu.dot_dimension_numbers<[1], [0], [0], [1], [0, 0, 1, 1], [], []>} : vector<8x128xf32>, vector<128x128xf32>, vector<8x128xf32> -> vector<8x128xf32>
    %c0_111 = arith.constant 0 : index
    %c0_112 = arith.constant 0 : index
    %180 = vector.load %arg11[%c0_111, %c0_112] : memref<1x128xf32, #tpu.memory_space<vmem>>, vector<1x128xf32>
    %181 = vector.broadcast %180 : vector<1x128xf32> to vector<8x128xf32>
    %182 = arith.addf %179, %181 : vector<8x128xf32>
    %c0_113 = arith.constant 0 : index
    %c0_114 = arith.constant 0 : index
    %183 = vector.load %arg12[%c0_113, %c0_114] : memref<8x128xf32, #tpu.memory_space<vmem>>, vector<8x128xf32>
    tpu.vector_store %arg12[%c0_113, %c0_114], %182 {strides = array<i32>} : memref<8x128xf32, #tpu.memory_space<vmem>>, vector<8x128xf32>,
    return
  }
  func.func @transform_0(%arg0: i32) -> (i32, i32, i32) {
    %c0_i32 = arith.constant 0 : i32
    %c0_i32_0 = arith.constant 0 : i32
    %c0_i32_1 = arith.constant 0 : i32
    return %c0_i32, %arg0, %c0_i32_0 : i32, i32, i32
  }
  func.func @transform_1(%arg0: i32) -> (i32, i32) {
    %c0_i32 = arith.constant 0 : i32
    %c0_i32_0 = arith.constant 0 : i32
    %c0_i32_1 = arith.constant 0 : i32
    return %c0_i32, %c0_i32_0 : i32, i32
  }
  func.func @transform_2(%arg0: i32) -> (i32, i32) {
    %c0_i32 = arith.constant 0 : i32
    %c0_i32_0 = arith.constant 0 : i32
    %c0_i32_1 = arith.constant 0 : i32
    return %c0_i32, %c0_i32_0 : i32, i32
  }
  func.func @transform_3(%arg0: i32) -> (i32, i32) {
    %c0_i32 = arith.constant 0 : i32
    %c0_i32_0 = arith.constant 0 : i32
    %c0_i32_1 = arith.constant 0 : i32
    return %c0_i32, %c0_i32_0 : i32, i32
  }
  func.func @transform_4(%arg0: i32) -> (i32, i32) {
    %c0_i32 = arith.constant 0 : i32
    %c0_i32_0 = arith.constant 0 : i32
    %c0_i32_1 = arith.constant 0 : i32
    return %c0_i32, %c0_i32_0 : i32, i32
  }
  func.func @transform_5(%arg0: i32) -> (i32, i32) {
    %c0_i32 = arith.constant 0 : i32
    %c0_i32_0 = arith.constant 0 : i32
    %c0_i32_1 = arith.constant 0 : i32
    return %c0_i32, %c0_i32_0 : i32, i32
  }
  func.func @transform_6(%arg0: i32) -> (i32, i32) {
    %c0_i32 = arith.constant 0 : i32
    %c0_i32_0 = arith.constant 0 : i32
    %c0_i32_1 = arith.constant 0 : i32
    return %c0_i32, %c0_i32_0 : i32, i32
  }
  func.func @transform_7(%arg0: i32) -> (i32, i32) {
    %c0_i32 = arith.constant 0 : i32
    %c0_i32_0 = arith.constant 0 : i32
    %c0_i32_1 = arith.constant 0 : i32
    return %c0_i32, %c0_i32_0 : i32, i32
  }
  func.func @transform_8(%arg0: i32) -> (i32, i32) {
    %c0_i32 = arith.constant 0 : i32
    %c0_i32_0 = arith.constant 0 : i32
    %c0_i32_1 = arith.constant 0 : i32
    return %c0_i32, %c0_i32_0 : i32, i32
  }
  func.func @transform_9(%arg0: i32) -> (i32, i32) {
    %c0_i32 = arith.constant 0 : i32
    %c0_i32_0 = arith.constant 0 : i32
    %c0_i32_1 = arith.constant 0 : i32
    return %c0_i32, %c0_i32_0 : i32, i32
  }
  func.func @transform_10(%arg0: i32) -> (i32, i32) {
    %c0_i32 = arith.constant 0 : i32
    %c0_i32_0 = arith.constant 0 : i32
    %c0_i32_1 = arith.constant 0 : i32
    return %c0_i32, %c0_i32_0 : i32, i32
  }
  func.func @transform_11(%arg0: i32) -> (i32, i32) {
    %c0_i32 = arith.constant 0 : i32
    %c0_i32_0 = arith.constant 0 : i32
    return %arg0, %c0_i32 : i32, i32
  }
}

</mosaic_0001>

<llo_original>
// kernel: rnn_forward_pallas.1
$region0: #{rnn_forward_pallas.1}
  #allocation0 [shape = 'u32[]', space=smem, size = 0x4, offset = 0x4, fixed_abs, tag = 'smem constant byte address 0x4 - core index']
  #allocation1 [shape = 'u32[144,128]{1,0:T(1,128)}', space=vmem, size = 0x12000, scoped, tag = 'internal scratch']
  #allocation2 [shape = 'f32[8,8,128]{2,1,0:T(8,128)}', space=vmem, size = 0x8000, scoped, tag = 'scratch operand']
  #allocation3 [shape = 'f32[8,8,128]{2,1,0:T(8,128)}', space=vmem, size = 0x8000, scoped, tag = 'scratch operand']
  %s0 = inlined_call_operand.vmem [shape: f32[8,8,128], index: 0, kind: input, shape index: {}]
  %s1 = inlined_call_operand.vmem [shape: f32[128,128], index: 1, kind: input, shape index: {}]
  %s2 = inlined_call_operand.vmem [shape: f32[128,128], index: 2, kind: input, shape index: {}]
  %s3 = inlined_call_operand.vmem [shape: f32[1,128], index: 3, kind: input, shape index: {}]
  %s4 = inlined_call_operand.vmem [shape: f32[128,128], index: 4, kind: input, shape index: {}]
  %s5 = inlined_call_operand.vmem [shape: f32[128,128], index: 5, kind: input, shape index: {}]
  %s6 = inlined_call_operand.vmem [shape: f32[1,128], index: 6, kind: input, shape index: {}]
  %s7 = inlined_call_operand.vmem [shape: f32[1,128], index: 7, kind: input, shape index: {}]
  %s8 = inlined_call_operand.vmem [shape: f32[1,128], index: 8, kind: input, shape index: {}]
  %s9 = inlined_call_operand.vmem [shape: f32[128,128], index: 9, kind: input, shape index: {}]
  %s10 = inlined_call_operand.vmem [shape: f32[1,128], index: 10, kind: input, shape index: {}]
  %s11 = inlined_call_operand.vmem [shape: f32[8,128], index: 11, kind: output, shape index: {}]
  %s12 = sld [smem:[#allocation0]]
  $region54: #{rnn_forward_pallas.1} parent=0
    _
  %s14 = ssub.s32 1, %s12
  %s15 = scalar_select 0, %s14, %s12
  // Predicated region
  $region2: #{rnn_forward_pallas.1} parent=0 // pred_check
    _
  $region3: #{rnn_forward_pallas.1} parent=0 // pred_check_branch
    %17 = sbr.rel (0) target = $region5
  $region4: #{rnn_forward_pallas.1} parent=0 // pred_region
    _
  $region5: #{rnn_forward_pallas.1} parent=0 // pred_fallthru
    _
  // Predicated region
  $region6: #{rnn_forward_pallas.1} parent=0 // pred_check
    _
  $region7: #{rnn_forward_pallas.1} parent=0 // pred_check_branch
    %19 = sbr.rel (0) target = $region9
  $region8: #{rnn_forward_pallas.1} parent=0 // pred_region
    _
  $region9: #{rnn_forward_pallas.1} parent=0 // pred_fallthru
    _
  // Predicated region
  $region10: #{rnn_forward_pallas.1} parent=0 // pred_check
    _
  $region11: #{rnn_forward_pallas.1} parent=0 // pred_check_branch
    %21 = sbr.rel (0) target = $region13
  $region12: #{rnn_forward_pallas.1} parent=0 // pred_region
    _
  $region13: #{rnn_forward_pallas.1} parent=0 // pred_fallthru
    _
  // Predicated region
  $region14: #{rnn_forward_pallas.1} parent=0 // pred_check
    _
  $region15: #{rnn_forward_pallas.1} parent=0 // pred_check_branch
    %23 = sbr.rel (0) target = $region17
  $region16: #{rnn_forward_pallas.1} parent=0 // pred_region
    _
  $region17: #{rnn_forward_pallas.1} parent=0 // pred_fallthru
    _
  // Predicated region
  $region18: #{rnn_forward_pallas.1} parent=0 // pred_check
    _
  $region19: #{rnn_forward_pallas.1} parent=0 // pred_check_branch
    %25 = sbr.rel (0) target = $region21
  $region20: #{rnn_forward_pallas.1} parent=0 // pred_region
    _
  $region21: #{rnn_forward_pallas.1} parent=0 // pred_fallthru
    _
  // Predicated region
  $region22: #{rnn_forward_pallas.1} parent=0 // pred_check
    _
  $region23: #{rnn_forward_pallas.1} parent=0 // pred_check_branch
    %27 = sbr.rel (0) target = $region25
  $region24: #{rnn_forward_pallas.1} parent=0 // pred_region
    _
  $region25: #{rnn_forward_pallas.1} parent=0 // pred_fallthru
    _
  // Predicated region
  $region26: #{rnn_forward_pallas.1} parent=0 // pred_check
    _
  $region27: #{rnn_forward_pallas.1} parent=0 // pred_check_branch
    %29 = sbr.rel (0) target = $region29
  $region28: #{rnn_forward_pallas.1} parent=0 // pred_region
    _
  $region29: #{rnn_forward_pallas.1} parent=0 // pred_fallthru
    _
  // Predicated region
  $region30: #{rnn_forward_pallas.1} parent=0 // pred_check
    _
  $region31: #{rnn_forward_pallas.1} parent=0 // pred_check_branch
    %31 = sbr.rel (0) target = $region33
  $region32: #{rnn_forward_pallas.1} parent=0 // pred_region
    _
  $region33: #{rnn_forward_pallas.1} parent=0 // pred_fallthru
    _
  // Predicated region
  $region34: #{rnn_forward_pallas.1} parent=0 // pred_check
    _
  $region35: #{rnn_forward_pallas.1} parent=0 // pred_check_branch
    %33 = sbr.rel (0) target = $region37
  $region36: #{rnn_forward_pallas.1} parent=0 // pred_region
    _
  $region37: #{rnn_forward_pallas.1} parent=0 // pred_fallthru
    _
  // Predicated region
  $region38: #{rnn_forward_pallas.1} parent=0 // pred_check
    _
  $region39: #{rnn_forward_pallas.1} parent=0 // pred_check_branch
    %35 = sbr.rel (0) target = $region41
  $region40: #{rnn_forward_pallas.1} parent=0 // pred_region
    _
  $region41: #{rnn_forward_pallas.1} parent=0 // pred_fallthru
    _
  // Predicated region
  $region42: #{rnn_forward_pallas.1} parent=0 // pred_check
    _
  $region43: #{rnn_forward_pallas.1} parent=0 // pred_check_branch
    %37 = sbr.rel (0) target = $region45
  $region44: #{rnn_forward_pallas.1} parent=0 // pred_region
    _
  $region45: #{rnn_forward_pallas.1} parent=0 // pred_fallthru
    _
  %v38 = vld [vmem:[%s1] sm:$0xff]
  %v39 = vld [vmem:[%s1 + $0x8] sm:$0xff]
  %v40 = vld [vmem:[%s1 + $0x10] sm:$0xff]
  %v41 = vld [vmem:[%s1 + $0x18] sm:$0xff]
  %v42 = vld [vmem:[%s1 + $0x20] sm:$0xff]
  %v43 = vld [vmem:[%s1 + $0x28] sm:$0xff]
  %v44 = vld [vmem:[%s1 + $0x30] sm:$0xff]
  %v45 = vld [vmem:[%s1 + $0x38] sm:$0xff]
  %v46 = vld [vmem:[%s1 + $0x40] sm:$0xff]
  %v47 = vld [vmem:[%s1 + $0x48] sm:$0xff]
  %v48 = vld [vmem:[%s1 + $0x50] sm:$0xff]
  %v49 = vld [vmem:[%s1 + $0x58] sm:$0xff]
  %v50 = vld [vmem:[%s1 + $0x60] sm:$0xff]
  %v51 = vld [vmem:[%s1 + $0x68] sm:$0xff]
  %v52 = vld [vmem:[%s1 + $0x70] sm:$0xff]
  %v53 = vld [vmem:[%s1 + $0x78] sm:$0xff]
  %v54 = vld [vmem:[%s2] sm:$0xff]
  %v55 = vld [vmem:[%s2 + $0x8] sm:$0xff]
  %v56 = vld [vmem:[%s2 + $0x10] sm:$0xff]
  %v57 = vld [vmem:[%s2 + $0x18] sm:$0xff]
  %v58 = vld [vmem:[%s2 + $0x20] sm:$0xff]
  %v59 = vld [vmem:[%s2 + $0x28] sm:$0xff]
  %v60 = vld [vmem:[%s2 + $0x30] sm:$0xff]
  %v61 = vld [vmem:[%s2 + $0x38] sm:$0xff]
  %v62 = vld [vmem:[%s2 + $0x40] sm:$0xff]
  %v63 = vld [vmem:[%s2 + $0x48] sm:$0xff]
  %v64 = vld [vmem:[%s2 + $0x50] sm:$0xff]
  %v65 = vld [vmem:[%s2 + $0x58] sm:$0xff]
  %v66 = vld [vmem:[%s2 + $0x60] sm:$0xff]
  %v67 = vld [vmem:[%s2 + $0x68] sm:$0xff]
  %v68 = vld [vmem:[%s2 + $0x70] sm:$0xff]
  %v69 = vld [vmem:[%s2 + $0x78] sm:$0xff]
  %v70 = vld [vmem:[%s3] sm:$0x1]
  %v71 = vld [vmem:[%s0] sm:$0xff]
  %v72 = vld [vmem:[%s0 + $0x8] sm:$0xff]
  %v73 = vld [vmem:[%s0 + $0x10] sm:$0xff]
  %v74 = vld [vmem:[%s0 + $0x18] sm:$0xff]
  %v75 = vld [vmem:[%s0 + $0x20] sm:$0xff]
  %v76 = vld [vmem:[%s0 + $0x28] sm:$0xff]
  %v77 = vld [vmem:[%s0 + $0x30] sm:$0xff]
  %v78 = vld [vmem:[%s0 + $0x38] sm:$0xff]
  %v80 = vlaneseq
  %v81 = vshrl.u32 %v80, 7
  %v82 = vsub.s32 0, %v81
  %v83 = vrot.slane %v70, %v82
  %85 = vmatprep.subr.mxu0 0.0
  %86 = vmatpush1.msra.mxu0 %v38
  %87 = vmatprep.subr.mxu0 0.0
  %88 = vmatpush1.msra.mxu0 %v39
  %89 = vmatprep.subr.mxu0 0.0
  %90 = vmatpush1.msra.mxu0 %v40
  %91 = vmatprep.subr.mxu0 0.0
  %92 = vmatpush1.msra.mxu0 %v41
  %93 = vmatprep.subr.mxu0 0.0
  %94 = vmatpush1.msra.mxu0 %v42
  %95 = vmatprep.subr.mxu0 0.0
  %96 = vmatpush1.msra.mxu0 %v43
  %97 = vmatprep.subr.mxu0 0.0
  %98 = vmatpush1.msra.mxu0 %v44
  %99 = vmatprep.subr.mxu0 0.0
  %100 = vmatpush1.msra.mxu0 %v45
  %101 = vmatprep.subr.mxu0 0.0
  %102 = vmatpush1.msra.mxu0 %v46
  %103 = vmatprep.subr.mxu0 0.0
  %104 = vmatpush1.msra.mxu0 %v47
  %105 = vmatprep.subr.mxu0 0.0
  %106 = vmatpush1.msra.mxu0 %v48
  %107 = vmatprep.subr.mxu0 0.0
  %108 = vmatpush1.msra.mxu0 %v49
  %109 = vmatprep.subr.mxu0 0.0
  %110 = vmatpush1.msra.mxu0 %v50
  %111 = vmatprep.subr.mxu0 0.0
  %112 = vmatpush1.msra.mxu0 %v51
  %113 = vmatprep.subr.mxu0 0.0
  %114 = vmatpush1.msra.mxu0 %v52
  %115 = vmatprep.subr.mxu0 0.0
  %116 = vmatpush1.msra.mxu0 %v53
  %117 = vmatprep.subr.mxu0 0.0
  %118 = vmatpush1.msra.mxu0 0.0
  %119 = vmatprep.subr.mxu0 0.0
  %120 = vmatpush1.msra.mxu0 0.0
  %121 = vmatprep.subr.mxu0 0.0
  %122 = vmatpush1.msra.mxu0 0.0
  %123 = vmatprep.subr.mxu0 0.0
  %124 = vmatpush1.msra.mxu0 0.0
  %125 = vmatprep.subr.mxu0 0.0
  %126 = vmatpush1.msra.mxu0 0.0
  %127 = vmatprep.subr.mxu0 0.0
  %128 = vmatpush1.msra.mxu0 0.0
  %129 = vmatprep.subr.mxu0 0.0
  %130 = vmatpush1.msra.mxu0 0.0
  %131 = vmatprep.subr.mxu0 0.0
  %132 = vmatpush1.msra.mxu0 0.0
  %133 = vmatprep.subr.mxu0 0.0
  %134 = vmatpush1.msra.mxu0 0.0
  %135 = vmatprep.subr.mxu0 0.0
  %136 = vmatpush1.msra.mxu0 0.0
  %137 = vmatprep.subr.mxu0 0.0
  %138 = vmatpush1.msra.mxu0 0.0
  %139 = vmatprep.subr.mxu0 0.0
  %140 = vmatpush1.msra.mxu0 0.0
  %141 = vmatprep.subr.mxu0 0.0
  %142 = vmatpush1.msra.mxu0 0.0
  %143 = vmatprep.subr.mxu0 0.0
  %144 = vmatpush1.msra.mxu0 0.0
  %145 = vmatprep.subr.mxu0 0.0
  %146 = vmatpush1.msra.mxu0 0.0
  %147 = vmatprep.subr.mxu0 0.0
  %148 = vmatpush1.msra.mxu0 0.0
  %149 = vmatprep.mubr.f32.mxu0 0.0
  %150 = vmatmul.mubr.f32.gmra.mrb[0].mxu0 %v71
  %v151 = vpop.f32.mrb[0].mxu0
  %v152 = vadd.f32 %v83, %v151
  %v153 = vpop.f32.mrb[0].mxu0
  %154 = vmatprep.mubr.f32.mxu0 0.0
  %155 = vmatmul.mubr.f32.gmra.mrb[0].mxu0 %v72
  %v156 = vpop.f32.mrb[0].mxu0
  %v157 = vadd.f32 %v83, %v156
  %v158 = vpop.f32.mrb[0].mxu0
  %159 = vmatprep.mubr.f32.mxu0 0.0
  %160 = vmatmul.mubr.f32.gmra.mrb[0].mxu0 %v73
  %v161 = vpop.f32.mrb[0].mxu0
  %v162 = vadd.f32 %v83, %v161
  %v163 = vpop.f32.mrb[0].mxu0
  %164 = vmatprep.mubr.f32.mxu0 0.0
  %165 = vmatmul.mubr.f32.gmra.mrb[0].mxu0 %v74
  %v166 = vpop.f32.mrb[0].mxu0
  %v167 = vadd.f32 %v83, %v166
  %v168 = vpop.f32.mrb[0].mxu0
  %169 = vmatprep.mubr.f32.mxu0 0.0
  %170 = vmatmul.mubr.f32.gmra.mrb[0].mxu0 %v75
  %v171 = vpop.f32.mrb[0].mxu0
  %v172 = vadd.f32 %v83, %v171
  %v173 = vpop.f32.mrb[0].mxu0
  %174 = vmatprep.mubr.f32.mxu0 0.0
  %175 = vmatmul.mubr.f32.gmra.mrb[0].mxu0 %v76
  %v176 = vpop.f32.mrb[0].mxu0
  %v177 = vadd.f32 %v83, %v176
  %v178 = vpop.f32.mrb[0].mxu0
  %179 = vmatprep.mubr.f32.mxu0 0.0
  %180 = vmatmul.mubr.f32.gmra.mrb[0].mxu0 %v77
  %v181 = vpop.f32.mrb[0].mxu0
  %v182 = vadd.f32 %v83, %v181
  %v183 = vpop.f32.mrb[0].mxu0
  %184 = vmatprep.mubr.f32.mxu0 0.0
  %185 = vmatmul.mubr.f32.gmra.mrb[0].mxu0 %v78
  %v186 = vpop.f32.mrb[0].mxu0
  %v187 = vadd.f32 %v83, %v186
  %v188 = vpop.f32.mrb[0].mxu0
  %189 = vdwg.mxu0
  %190 = vst [vmem:[#allocation2] sm:$0xff] %v152
  %191 = vst [vmem:[#allocation2 + $0x8] sm:$0xff] %v157
  %192 = vst [vmem:[#allocation2 + $0x10] sm:$0xff] %v162
  %193 = vst [vmem:[#allocation2 + $0x18] sm:$0xff] %v167
  %194 = vst [vmem:[#allocation2 + $0x20] sm:$0xff] %v172
  %195 = vst [vmem:[#allocation2 + $0x28] sm:$0xff] %v177
  %196 = vst [vmem:[#allocation2 + $0x30] sm:$0xff] %v182
  %197 = vst [vmem:[#allocation2 + $0x38] sm:$0xff] %v187
  %v198 = vld [vmem:[#allocation2] sm:$0xff]
  %199 = vmatprep.subr.mxu0 0.0
  %200 = vmatpush1.msra.mxu0 %v54
  %201 = vmatprep.subr.mxu0 0.0
  %202 = vmatpush1.msra.mxu0 %v55
  %203 = vmatprep.subr.mxu0 0.0
  %204 = vmatpush1.msra.mxu0 %v56
  %205 = vmatprep.subr.mxu0 0.0
  %206 = vmatpush1.msra.mxu0 %v57
  %207 = vmatprep.subr.mxu0 0.0
  %208 = vmatpush1.msra.mxu0 %v58
  %209 = vmatprep.subr.mxu0 0.0
  %210 = vmatpush1.msra.mxu0 %v59
  %211 = vmatprep.subr.mxu0 0.0
  %212 = vmatpush1.msra.mxu0 %v60
  %213 = vmatprep.subr.mxu0 0.0
  %214 = vmatpush1.msra.mxu0 %v61
  %215 = vmatprep.subr.mxu0 0.0
  %216 = vmatpush1.msra.mxu0 %v62
  %217 = vmatprep.subr.mxu0 0.0
  %218 = vmatpush1.msra.mxu0 %v63
  %219 = vmatprep.subr.mxu0 0.0
  %220 = vmatpush1.msra.mxu0 %v64
  %221 = vmatprep.subr.mxu0 0.0
  %222 = vmatpush1.msra.mxu0 %v65
  %223 = vmatprep.subr.mxu0 0.0
  %224 = vmatpush1.msra.mxu0 %v66
  %225 = vmatprep.subr.mxu0 0.0
  %226 = vmatpush1.msra.mxu0 %v67
  %227 = vmatprep.subr.mxu0 0.0
  %228 = vmatpush1.msra.mxu0 %v68
  %229 = vmatprep.subr.mxu0 0.0
  %230 = vmatpush1.msra.mxu0 %v69
  %231 = vmatprep.subr.mxu0 0.0
  %232 = vmatpush1.msra.mxu0 0.0
  %233 = vmatprep.subr.mxu0 0.0
  %234 = vmatpush1.msra.mxu0 0.0
  %235 = vmatprep.subr.mxu0 0.0
  %236 = vmatpush1.msra.mxu0 0.0
  %237 = vmatprep.subr.mxu0 0.0
  %238 = vmatpush1.msra.mxu0 0.0
  %239 = vmatprep.subr.mxu0 0.0
  %240 = vmatpush1.msra.mxu0 0.0
  %241 = vmatprep.subr.mxu0 0.0
  %242 = vmatpush1.msra.mxu0 0.0
  %243 = vmatprep.subr.mxu0 0.0
  %244 = vmatpush1.msra.mxu0 0.0
  %245 = vmatprep.subr.mxu0 0.0
  %246 = vmatpush1.msra.mxu0 0.0
  %247 = vmatprep.subr.mxu0 0.0
  %248 = vmatpush1.msra.mxu0 0.0
  %249 = vmatprep.subr.mxu0 0.0
  %250 = vmatpush1.msra.mxu0 0.0
  %251 = vmatprep.subr.mxu0 0.0
  %252 = vmatpush1.msra.mxu0 0.0
  %253 = vmatprep.subr.mxu0 0.0
  %254 = vmatpush1.msra.mxu0 0.0
  %255 = vmatprep.subr.mxu0 0.0
  %256 = vmatpush1.msra.mxu0 0.0
  %257 = vmatprep.subr.mxu0 0.0
  %258 = vmatpush1.msra.mxu0 0.0
  %259 = vmatprep.subr.mxu0 0.0
  %260 = vmatpush1.msra.mxu0 0.0
  %261 = vmatprep.subr.mxu0 0.0
  %262 = vmatpush1.msra.mxu0 0.0
  %263 = vmatprep.mubr.f32.mxu0 0.0
  %264 = vmatmul.mubr.f32.gmra.mrb[0].mxu0 0.0
  %v265 = vpop.f32.mrb[0].mxu0
  %v266 = vadd.f32 0.0, %v265
  %v267 = vpop.f32.mrb[0].mxu0
  %268 = vdwg.mxu0
  %v269 = vadd.f32 %v198, %v266
  %v270 = vtanh.pop %v269
  %271 = vst [vmem:[#allocation3] sm:$0xff] %v270
  %s272 = scalar_lea.vmem [#allocation2], 8
  %v273 = vld [vmem:[%s272] sm:$0xff]
  %274 = vmatprep.subr.mxu0 0.0
  %275 = vmatpush1.msra.mxu0 %v54
  %276 = vmatprep.subr.mxu0 0.0
  %277 = vmatpush1.msra.mxu0 %v55
  %278 = vmatprep.subr.mxu0 0.0
  %279 = vmatpush1.msra.mxu0 %v56
  %280 = vmatprep.subr.mxu0 0.0
  %281 = vmatpush1.msra.mxu0 %v57
  %282 = vmatprep.subr.mxu0 0.0
  %283 = vmatpush1.msra.mxu0 %v58
  %284 = vmatprep.subr.mxu0 0.0
  %285 = vmatpush1.msra.mxu0 %v59
  %286 = vmatprep.subr.mxu0 0.0
  %287 = vmatpush1.msra.mxu0 %v60
  %288 = vmatprep.subr.mxu0 0.0
  %289 = vmatpush1.msra.mxu0 %v61
  %290 = vmatprep.subr.mxu0 0.0
  %291 = vmatpush1.msra.mxu0 %v62
  %292 = vmatprep.subr.mxu0 0.0
  %293 = vmatpush1.msra.mxu0 %v63
  %294 = vmatprep.subr.mxu0 0.0
  %295 = vmatpush1.msra.mxu0 %v64
  %296 = vmatprep.subr.mxu0 0.0
  %297 = vmatpush1.msra.mxu0 %v65
  %298 = vmatprep.subr.mxu0 0.0
  %299 = vmatpush1.msra.mxu0 %v66
  %300 = vmatprep.subr.mxu0 0.0
  %301 = vmatpush1.msra.mxu0 %v67
  %302 = vmatprep.subr.mxu0 0.0
  %303 = vmatpush1.msra.mxu0 %v68
  %304 = vmatprep.subr.mxu0 0.0
  %305 = vmatpush1.msra.mxu0 %v69
  %306 = vmatprep.subr.mxu0 0.0
  %307 = vmatpush1.msra.mxu0 0.0
  %308 = vmatprep.subr.mxu0 0.0
  %309 = vmatpush1.msra.mxu0 0.0
  %310 = vmatprep.subr.mxu0 0.0
  %311 = vmatpush1.msra.mxu0 0.0
  %312 = vmatprep.subr.mxu0 0.0
  %313 = vmatpush1.msra.mxu0 0.0
  %314 = vmatprep.subr.mxu0 0.0
  %315 = vmatpush1.msra.mxu0 0.0
  %316 = vmatprep.subr.mxu0 0.0
  %317 = vmatpush1.msra.mxu0 0.0
  %318 = vmatprep.subr.mxu0 0.0
  %319 = vmatpush1.msra.mxu0 0.0
  %320 = vmatprep.subr.mxu0 0.0
  %321 = vmatpush1.msra.mxu0 0.0
  %322 = vmatprep.subr.mxu0 0.0
  %323 = vmatpush1.msra.mxu0 0.0
  %324 = vmatprep.subr.mxu0 0.0
  %325 = vmatpush1.msra.mxu0 0.0
  %326 = vmatprep.subr.mxu0 0.0
  %327 = vmatpush1.msra.mxu0 0.0
  %328 = vmatprep.subr.mxu0 0.0
  %329 = vmatpush1.msra.mxu0 0.0
  %330 = vmatprep.subr.mxu0 0.0
  %331 = vmatpush1.msra.mxu0 0.0
  %332 = vmatprep.subr.mxu0 0.0
  %333 = vmatpush1.msra.mxu0 0.0
  %334 = vmatprep.subr.mxu0 0.0
  %335 = vmatpush1.msra.mxu0 0.0
  %336 = vmatprep.subr.mxu0 0.0
  %337 = vmatpush1.msra.mxu0 0.0
  %338 = vmatprep.mubr.f32.mxu0 0.0
  %339 = vmatmul.mubr.f32.gmra.mrb[0].mxu0 %v270
  %v340 = vpop.f32.mrb[0].mxu0
  %v341 = vadd.f32 0.0, %v340
  %v342 = vpop.f32.mrb[0].mxu0
  %343 = vdwg.mxu0
  %v344 = vadd.f32 %v273, %v341
  %v345 = vtanh.pop %v344
  %s346 = scalar_lea.vmem [#allocation3], 8
  %347 = vst [vmem:[%s346] sm:$0xff] %v345
  %s348 = scalar_lea.vmem [#allocation2], 16
  %v349 = vld [vmem:[%s348] sm:$0xff]
  %350 = vmatprep.subr.mxu0 0.0
  %351 = vmatpush1.msra.mxu0 %v54
  %352 = vmatprep.subr.mxu0 0.0
  %353 = vmatpush1.msra.mxu0 %v55
  %354 = vmatprep.subr.mxu0 0.0
  %355 = vmatpush1.msra.mxu0 %v56
  %356 = vmatprep.subr.mxu0 0.0
  %357 = vmatpush1.msra.mxu0 %v57
  %358 = vmatprep.subr.mxu0 0.0
  %359 = vmatpush1.msra.mxu0 %v58
  %360 = vmatprep.subr.mxu0 0.0
  %361 = vmatpush1.msra.mxu0 %v59
  %362 = vmatprep.subr.mxu0 0.0
  %363 = vmatpush1.msra.mxu0 %v60
  %364 = vmatprep.subr.mxu0 0.0
  %365 = vmatpush1.msra.mxu0 %v61
  %366 = vmatprep.subr.mxu0 0.0
  %367 = vmatpush1.msra.mxu0 %v62
  %368 = vmatprep.subr.mxu0 0.0
  %369 = vmatpush1.msra.mxu0 %v63
  %370 = vmatprep.subr.mxu0 0.0
  %371 = vmatpush1.msra.mxu0 %v64
  %372 = vmatprep.subr.mxu0 0.0
  %373 = vmatpush1.msra.mxu0 %v65
  %374 = vmatprep.subr.mxu0 0.0
  %375 = vmatpush1.msra.mxu0 %v66
  %376 = vmatprep.subr.mxu0 0.0
  %377 = vmatpush1.msra.mxu0 %v67
  %378 = vmatprep.subr.mxu0 0.0
  %379 = vmatpush1.msra.mxu0 %v68
  %380 = vmatprep.subr.mxu0 0.0
  %381 = vmatpush1.msra.mxu0 %v69
  %382 = vmatprep.subr.mxu0 0.0
  %383 = vmatpush1.msra.mxu0 0.0
  %384 = vmatprep.subr.mxu0 0.0
  %385 = vmatpush1.msra.mxu0 0.0
  %386 = vmatprep.subr.mxu0 0.0
  %387 = vmatpush1.msra.mxu0 0.0
  %388 = vmatprep.subr.mxu0 0.0
  %389 = vmatpush1.msra.mxu0 0.0
  %390 = vmatprep.subr.mxu0 0.0
  %391 = vmatpush1.msra.mxu0 0.0
  %392 = vmatprep.subr.mxu0 0.0
  %393 = vmatpush1.msra.mxu0 0.0
  %394 = vmatprep.subr.mxu0 0.0
  %395 = vmatpush1.msra.mxu0 0.0
  %396 = vmatprep.subr.mxu0 0.0
  %397 = vmatpush1.msra.mxu0 0.0
  %398 = vmatprep.subr.mxu0 0.0
  %399 = vmatpush1.msra.mxu0 0.0
  %400 = vmatprep.subr.mxu0 0.0
  %401 = vmatpush1.msra.mxu0 0.0
  %402 = vmatprep.subr.mxu0 0.0
  %403 = vmatpush1.msra.mxu0 0.0
  %404 = vmatprep.subr.mxu0 0.0
  %405 = vmatpush1.msra.mxu0 0.0
  %406 = vmatprep.subr.mxu0 0.0
  %407 = vmatpush1.msra.mxu0 0.0
  %408 = vmatprep.subr.mxu0 0.0
  %409 = vmatpush1.msra.mxu0 0.0
  %410 = vmatprep.subr.mxu0 0.0
  %411 = vmatpush1.msra.mxu0 0.0
  %412 = vmatprep.subr.mxu0 0.0
  %413 = vmatpush1.msra.mxu0 0.0
  %414 = vmatprep.mubr.f32.mxu0 0.0
  %415 = vmatmul.mubr.f32.gmra.mrb[0].mxu0 %v345
  %v416 = vpop.f32.mrb[0].mxu0
  %v417 = vadd.f32 0.0, %v416
  %v418 = vpop.f32.mrb[0].mxu0
  %419 = vdwg.mxu0
  %v420 = vadd.f32 %v349, %v417
  %v421 = vtanh.pop %v420
  %s422 = scalar_lea.vmem [#allocation3], 16
  %423 = vst [vmem:[%s422] sm:$0xff] %v421
  %s424 = scalar_lea.vmem [#allocation2], 24
  %v425 = vld [vmem:[%s424] sm:$0xff]
  %426 = vmatprep.subr.mxu0 0.0
  %427 = vmatpush1.msra.mxu0 %v54
  %428 = vmatprep.subr.mxu0 0.0
  %429 = vmatpush1.msra.mxu0 %v55
  %430 = vmatprep.subr.mxu0 0.0
  %431 = vmatpush1.msra.mxu0 %v56
  %432 = vmatprep.subr.mxu0 0.0
  %433 = vmatpush1.msra.mxu0 %v57
  %434 = vmatprep.subr.mxu0 0.0
  %435 = vmatpush1.msra.mxu0 %v58
  %436 = vmatprep.subr.mxu0 0.0
  %437 = vmatpush1.msra.mxu0 %v59
  %438 = vmatprep.subr.mxu0 0.0
  %439 = vmatpush1.msra.mxu0 %v60
  %440 = vmatprep.subr.mxu0 0.0
  %441 = vmatpush1.msra.mxu0 %v61
  %442 = vmatprep.subr.mxu0 0.0
  %443 = vmatpush1.msra.mxu0 %v62
  %444 = vmatprep.subr.mxu0 0.0
  %445 = vmatpush1.msra.mxu0 %v63
  %446 = vmatprep.subr.mxu0 0.0
  %447 = vmatpush1.msra.mxu0 %v64
  %448 = vmatprep.subr.mxu0 0.0
  %449 = vmatpush1.msra.mxu0 %v65
  %450 = vmatprep.subr.mxu0 0.0
  %451 = vmatpush1.msra.mxu0 %v66
  %452 = vmatprep.subr.mxu0 0.0
  %453 = vmatpush1.msra.mxu0 %v67
  %454 = vmatprep.subr.mxu0 0.0
  %455 = vmatpush1.msra.mxu0 %v68
  %456 = vmatprep.subr.mxu0 0.0
  %457 = vmatpush1.msra.mxu0 %v69
  %458 = vmatprep.subr.mxu0 0.0
  %459 = vmatpush1.msra.mxu0 0.0
  %460 = vmatprep.subr.mxu0 0.0
  %461 = vmatpush1.msra.mxu0 0.0
  %462 = vmatprep.subr.mxu0 0.0
  %463 = vmatpush1.msra.mxu0 0.0
  %464 = vmatprep.subr.mxu0 0.0
  %465 = vmatpush1.msra.mxu0 0.0
  %466 = vmatprep.subr.mxu0 0.0
  %467 = vmatpush1.msra.mxu0 0.0
  %468 = vmatprep.subr.mxu0 0.0
  %469 = vmatpush1.msra.mxu0 0.0
  %470 = vmatprep.subr.mxu0 0.0
  %471 = vmatpush1.msra.mxu0 0.0
  %472 = vmatprep.subr.mxu0 0.0
  %473 = vmatpush1.msra.mxu0 0.0
  %474 = vmatprep.subr.mxu0 0.0
  %475 = vmatpush1.msra.mxu0 0.0
  %476 = vmatprep.subr.mxu0 0.0
  %477 = vmatpush1.msra.mxu0 0.0
  %478 = vmatprep.subr.mxu0 0.0
  %479 = vmatpush1.msra.mxu0 0.0
  %480 = vmatprep.subr.mxu0 0.0
  %481 = vmatpush1.msra.mxu0 0.0
  %482 = vmatprep.subr.mxu0 0.0
  %483 = vmatpush1.msra.mxu0 0.0
  %484 = vmatprep.subr.mxu0 0.0
  %485 = vmatpush1.msra.mxu0 0.0
  %486 = vmatprep.subr.mxu0 0.0
  %487 = vmatpush1.msra.mxu0 0.0
  %488 = vmatprep.subr.mxu0 0.0
  %489 = vmatpush1.msra.mxu0 0.0
  %490 = vmatprep.mubr.f32.mxu0 0.0
  %491 = vmatmul.mubr.f32.gmra.mrb[0].mxu0 %v421
  %v492 = vpop.f32.mrb[0].mxu0
  %v493 = vadd.f32 0.0, %v492
  %v494 = vpop.f32.mrb[0].mxu0
  %495 = vdwg.mxu0
  %v496 = vadd.f32 %v425, %v493
  %v497 = vtanh.pop %v496
  %s498 = scalar_lea.vmem [#allocation3], 24
  %499 = vst [vmem:[%s498] sm:$0xff] %v497
  %s500 = scalar_lea.vmem [#allocation2], 32
  %v501 = vld [vmem:[%s500] sm:$0xff]
  %502 = vmatprep.subr.mxu0 0.0
  %503 = vmatpush1.msra.mxu0 %v54
  %504 = vmatprep.subr.mxu0 0.0
  %505 = vmatpush1.msra.mxu0 %v55
  %506 = vmatprep.subr.mxu0 0.0
  %507 = vmatpush1.msra.mxu0 %v56
  %508 = vmatprep.subr.mxu0 0.0
  %509 = vmatpush1.msra.mxu0 %v57
  %510 = vmatprep.subr.mxu0 0.0
  %511 = vmatpush1.msra.mxu0 %v58
  %512 = vmatprep.subr.mxu0 0.0
  %513 = vmatpush1.msra.mxu0 %v59
  %514 = vmatprep.subr.mxu0 0.0
  %515 = vmatpush1.msra.mxu0 %v60
  %516 = vmatprep.subr.mxu0 0.0
  %517 = vmatpush1.msra.mxu0 %v61
  %518 = vmatprep.subr.mxu0 0.0
  %519 = vmatpush1.msra.mxu0 %v62
  %520 = vmatprep.subr.mxu0 0.0
  %521 = vmatpush1.msra.mxu0 %v63
  %522 = vmatprep.subr.mxu0 0.0
  %523 = vmatpush1.msra.mxu0 %v64
  %524 = vmatprep.subr.mxu0 0.0
  %525 = vmatpush1.msra.mxu0 %v65
  %526 = vmatprep.subr.mxu0 0.0
  %527 = vmatpush1.msra.mxu0 %v66
  %528 = vmatprep.subr.mxu0 0.0
  %529 = vmatpush1.msra.mxu0 %v67
  %530 = vmatprep.subr.mxu0 0.0
  %531 = vmatpush1.msra.mxu0 %v68
  %532 = vmatprep.subr.mxu0 0.0
  %533 = vmatpush1.msra.mxu0 %v69
  %534 = vmatprep.subr.mxu0 0.0
  %535 = vmatpush1.msra.mxu0 0.0
  %536 = vmatprep.subr.mxu0 0.0
  %537 = vmatpush1.msra.mxu0 0.0
  %538 = vmatprep.subr.mxu0 0.0
  %539 = vmatpush1.msra.mxu0 0.0
  %540 = vmatprep.subr.mxu0 0.0
  %541 = vmatpush1.msra.mxu0 0.0
  %542 = vmatprep.subr.mxu0 0.0
  %543 = vmatpush1.msra.mxu0 0.0
  %544 = vmatprep.subr.mxu0 0.0
  %545 = vmatpush1.msra.mxu0 0.0
  %546 = vmatprep.subr.mxu0 0.0
  %547 = vmatpush1.msra.mxu0 0.0
  %548 = vmatprep.subr.mxu0 0.0
  %549 = vmatpush1.msra.mxu0 0.0
  %550 = vmatprep.subr.mxu0 0.0
  %551 = vmatpush1.msra.mxu0 0.0
  %552 = vmatprep.subr.mxu0 0.0
  %553 = vmatpush1.msra.mxu0 0.0
  %554 = vmatprep.subr.mxu0 0.0
  %555 = vmatpush1.msra.mxu0 0.0
  %556 = vmatprep.subr.mxu0 0.0
  %557 = vmatpush1.msra.mxu0 0.0
  %558 = vmatprep.subr.mxu0 0.0
  %559 = vmatpush1.msra.mxu0 0.0
  %560 = vmatprep.subr.mxu0 0.0
  %561 = vmatpush1.msra.mxu0 0.0
  %562 = vmatprep.subr.mxu0 0.0
  %563 = vmatpush1.msra.mxu0 0.0
  %564 = vmatprep.subr.mxu0 0.0
  %565 = vmatpush1.msra.mxu0 0.0
  %566 = vmatprep.mubr.f32.mxu0 0.0
  %567 = vmatmul.mubr.f32.gmra.mrb[0].mxu0 %v497
  %v568 = vpop.f32.mrb[0].mxu0
  %v569 = vadd.f32 0.0, %v568
  %v570 = vpop.f32.mrb[0].mxu0
  %571 = vdwg.mxu0
  %v572 = vadd.f32 %v501, %v569
  %v573 = vtanh.pop %v572
  %s574 = scalar_lea.vmem [#allocation3], 32
  %575 = vst [vmem:[%s574] sm:$0xff] %v573
  %s576 = scalar_lea.vmem [#allocation2], 40
  %v577 = vld [vmem:[%s576] sm:$0xff]
  %578 = vmatprep.subr.mxu0 0.0
  %579 = vmatpush1.msra.mxu0 %v54
  %580 = vmatprep.subr.mxu0 0.0
  %581 = vmatpush1.msra.mxu0 %v55
  %582 = vmatprep.subr.mxu0 0.0
  %583 = vmatpush1.msra.mxu0 %v56
  %584 = vmatprep.subr.mxu0 0.0
  %585 = vmatpush1.msra.mxu0 %v57
  %586 = vmatprep.subr.mxu0 0.0
  %587 = vmatpush1.msra.mxu0 %v58
  %588 = vmatprep.subr.mxu0 0.0
  %589 = vmatpush1.msra.mxu0 %v59
  %590 = vmatprep.subr.mxu0 0.0
  %591 = vmatpush1.msra.mxu0 %v60
  %592 = vmatprep.subr.mxu0 0.0
  %593 = vmatpush1.msra.mxu0 %v61
  %594 = vmatprep.subr.mxu0 0.0
  %595 = vmatpush1.msra.mxu0 %v62
  %596 = vmatprep.subr.mxu0 0.0
  %597 = vmatpush1.msra.mxu0 %v63
  %598 = vmatprep.subr.mxu0 0.0
  %599 = vmatpush1.msra.mxu0 %v64
  %600 = vmatprep.subr.mxu0 0.0
  %601 = vmatpush1.msra.mxu0 %v65
  %602 = vmatprep.subr.mxu0 0.0
  %603 = vmatpush1.msra.mxu0 %v66
  %604 = vmatprep.subr.mxu0 0.0
  %605 = vmatpush1.msra.mxu0 %v67
  %606 = vmatprep.subr.mxu0 0.0
  %607 = vmatpush1.msra.mxu0 %v68
  %608 = vmatprep.subr.mxu0 0.0
  %609 = vmatpush1.msra.mxu0 %v69
  %610 = vmatprep.subr.mxu0 0.0
  %611 = vmatpush1.msra.mxu0 0.0
  %612 = vmatprep.subr.mxu0 0.0
  %613 = vmatpush1.msra.mxu0 0.0
  %614 = vmatprep.subr.mxu0 0.0
  %615 = vmatpush1.msra.mxu0 0.0
  %616 = vmatprep.subr.mxu0 0.0
  %617 = vmatpush1.msra.mxu0 0.0
  %618 = vmatprep.subr.mxu0 0.0
  %619 = vmatpush1.msra.mxu0 0.0
  %620 = vmatprep.subr.mxu0 0.0
  %621 = vmatpush1.msra.mxu0 0.0
  %622 = vmatprep.subr.mxu0 0.0
  %623 = vmatpush1.msra.mxu0 0.0
  %624 = vmatprep.subr.mxu0 0.0
  %625 = vmatpush1.msra.mxu0 0.0
  %626 = vmatprep.subr.mxu0 0.0
  %627 = vmatpush1.msra.mxu0 0.0
  %628 = vmatprep.subr.mxu0 0.0
  %629 = vmatpush1.msra.mxu0 0.0
  %630 = vmatprep.subr.mxu0 0.0
  %631 = vmatpush1.msra.mxu0 0.0
  %632 = vmatprep.subr.mxu0 0.0
  %633 = vmatpush1.msra.mxu0 0.0
  %634 = vmatprep.subr.mxu0 0.0
  %635 = vmatpush1.msra.mxu0 0.0
  %636 = vmatprep.subr.mxu0 0.0
  %637 = vmatpush1.msra.mxu0 0.0
  %638 = vmatprep.subr.mxu0 0.0
  %639 = vmatpush1.msra.mxu0 0.0
  %640 = vmatprep.subr.mxu0 0.0
  %641 = vmatpush1.msra.mxu0 0.0
  %642 = vmatprep.mubr.f32.mxu0 0.0
  %643 = vmatmul.mubr.f32.gmra.mrb[0].mxu0 %v573
  %v644 = vpop.f32.mrb[0].mxu0
  %v645 = vadd.f32 0.0, %v644
  %v646 = vpop.f32.mrb[0].mxu0
  %647 = vdwg.mxu0
  %v648 = vadd.f32 %v577, %v645
  %v649 = vtanh.pop %v648
  %s650 = scalar_lea.vmem [#allocation3], 40
  %651 = vst [vmem:[%s650] sm:$0xff] %v649
  %s652 = scalar_lea.vmem [#allocation2], 48
  %v653 = vld [vmem:[%s652] sm:$0xff]
  %654 = vmatprep.subr.mxu0 0.0
  %655 = vmatpush1.msra.mxu0 %v54
  %656 = vmatprep.subr.mxu0 0.0
  %657 = vmatpush1.msra.mxu0 %v55
  %658 = vmatprep.subr.mxu0 0.0
  %659 = vmatpush1.msra.mxu0 %v56
  %660 = vmatprep.subr.mxu0 0.0
  %661 = vmatpush1.msra.mxu0 %v57
  %662 = vmatprep.subr.mxu0 0.0
  %663 = vmatpush1.msra.mxu0 %v58
  %664 = vmatprep.subr.mxu0 0.0
  %665 = vmatpush1.msra.mxu0 %v59
  %666 = vmatprep.subr.mxu0 0.0
  %667 = vmatpush1.msra.mxu0 %v60
  %668 = vmatprep.subr.mxu0 0.0
  %669 = vmatpush1.msra.mxu0 %v61
  %670 = vmatprep.subr.mxu0 0.0
  %671 = vmatpush1.msra.mxu0 %v62
  %672 = vmatprep.subr.mxu0 0.0
  %673 = vmatpush1.msra.mxu0 %v63
  %674 = vmatprep.subr.mxu0 0.0
  %675 = vmatpush1.msra.mxu0 %v64
  %676 = vmatprep.subr.mxu0 0.0
  %677 = vmatpush1.msra.mxu0 %v65
  %678 = vmatprep.subr.mxu0 0.0
  %679 = vmatpush1.msra.mxu0 %v66
  %680 = vmatprep.subr.mxu0 0.0
  %681 = vmatpush1.msra.mxu0 %v67
  %682 = vmatprep.subr.mxu0 0.0
  %683 = vmatpush1.msra.mxu0 %v68
  %684 = vmatprep.subr.mxu0 0.0
  %685 = vmatpush1.msra.mxu0 %v69
  %686 = vmatprep.subr.mxu0 0.0
  %687 = vmatpush1.msra.mxu0 0.0
  %688 = vmatprep.subr.mxu0 0.0
  %689 = vmatpush1.msra.mxu0 0.0
  %690 = vmatprep.subr.mxu0 0.0
  %691 = vmatpush1.msra.mxu0 0.0
  %692 = vmatprep.subr.mxu0 0.0
  %693 = vmatpush1.msra.mxu0 0.0
  %694 = vmatprep.subr.mxu0 0.0
  %695 = vmatpush1.msra.mxu0 0.0
  %696 = vmatprep.subr.mxu0 0.0
  %697 = vmatpush1.msra.mxu0 0.0
  %698 = vmatprep.subr.mxu0 0.0
  %699 = vmatpush1.msra.mxu0 0.0
  %700 = vmatprep.subr.mxu0 0.0
  %701 = vmatpush1.msra.mxu0 0.0
  %702 = vmatprep.subr.mxu0 0.0
  %703 = vmatpush1.msra.mxu0 0.0
  %704 = vmatprep.subr.mxu0 0.0
  %705 = vmatpush1.msra.mxu0 0.0
  %706 = vmatprep.subr.mxu0 0.0
  %707 = vmatpush1.msra.mxu0 0.0
  %708 = vmatprep.subr.mxu0 0.0
  %709 = vmatpush1.msra.mxu0 0.0
  %710 = vmatprep.subr.mxu0 0.0
  %711 = vmatpush1.msra.mxu0 0.0
  %712 = vmatprep.subr.mxu0 0.0
  %713 = vmatpush1.msra.mxu0 0.0
  %714 = vmatprep.subr.mxu0 0.0
  %715 = vmatpush1.msra.mxu0 0.0
  %716 = vmatprep.subr.mxu0 0.0
  %717 = vmatpush1.msra.mxu0 0.0
  %718 = vmatprep.mubr.f32.mxu0 0.0
  %719 = vmatmul.mubr.f32.gmra.mrb[0].mxu0 %v649
  %v720 = vpop.f32.mrb[0].mxu0
  %v721 = vadd.f32 0.0, %v720
  %v722 = vpop.f32.mrb[0].mxu0
  %723 = vdwg.mxu0
  %v724 = vadd.f32 %v653, %v721
  %v725 = vtanh.pop %v724
  %s726 = scalar_lea.vmem [#allocation3], 48
  %727 = vst [vmem:[%s726] sm:$0xff] %v725
  %s728 = scalar_lea.vmem [#allocation2], 56
  %v729 = vld [vmem:[%s728] sm:$0xff]
  %730 = vmatprep.subr.mxu0 0.0
  %731 = vmatpush1.msra.mxu0 %v54
  %732 = vmatprep.subr.mxu0 0.0
  %733 = vmatpush1.msra.mxu0 %v55
  %734 = vmatprep.subr.mxu0 0.0
  %735 = vmatpush1.msra.mxu0 %v56
  %736 = vmatprep.subr.mxu0 0.0
  %737 = vmatpush1.msra.mxu0 %v57
  %738 = vmatprep.subr.mxu0 0.0
  %739 = vmatpush1.msra.mxu0 %v58
  %740 = vmatprep.subr.mxu0 0.0
  %741 = vmatpush1.msra.mxu0 %v59
  %742 = vmatprep.subr.mxu0 0.0
  %743 = vmatpush1.msra.mxu0 %v60
  %744 = vmatprep.subr.mxu0 0.0
  %745 = vmatpush1.msra.mxu0 %v61
  %746 = vmatprep.subr.mxu0 0.0
  %747 = vmatpush1.msra.mxu0 %v62
  %748 = vmatprep.subr.mxu0 0.0
  %749 = vmatpush1.msra.mxu0 %v63
  %750 = vmatprep.subr.mxu0 0.0
  %751 = vmatpush1.msra.mxu0 %v64
  %752 = vmatprep.subr.mxu0 0.0
  %753 = vmatpush1.msra.mxu0 %v65
  %754 = vmatprep.subr.mxu0 0.0
  %755 = vmatpush1.msra.mxu0 %v66
  %756 = vmatprep.subr.mxu0 0.0
  %757 = vmatpush1.msra.mxu0 %v67
  %758 = vmatprep.subr.mxu0 0.0
  %759 = vmatpush1.msra.mxu0 %v68
  %760 = vmatprep.subr.mxu0 0.0
  %761 = vmatpush1.msra.mxu0 %v69
  %762 = vmatprep.subr.mxu0 0.0
  %763 = vmatpush1.msra.mxu0 0.0
  %764 = vmatprep.subr.mxu0 0.0
  %765 = vmatpush1.msra.mxu0 0.0
  %766 = vmatprep.subr.mxu0 0.0
  %767 = vmatpush1.msra.mxu0 0.0
  %768 = vmatprep.subr.mxu0 0.0
  %769 = vmatpush1.msra.mxu0 0.0
  %770 = vmatprep.subr.mxu0 0.0
  %771 = vmatpush1.msra.mxu0 0.0
  %772 = vmatprep.subr.mxu0 0.0
  %773 = vmatpush1.msra.mxu0 0.0
  %774 = vmatprep.subr.mxu0 0.0
  %775 = vmatpush1.msra.mxu0 0.0
  %776 = vmatprep.subr.mxu0 0.0
  %777 = vmatpush1.msra.mxu0 0.0
  %778 = vmatprep.subr.mxu0 0.0
  %779 = vmatpush1.msra.mxu0 0.0
  %780 = vmatprep.subr.mxu0 0.0
  %781 = vmatpush1.msra.mxu0 0.0
  %782 = vmatprep.subr.mxu0 0.0
  %783 = vmatpush1.msra.mxu0 0.0
  %784 = vmatprep.subr.mxu0 0.0
  %785 = vmatpush1.msra.mxu0 0.0
  %786 = vmatprep.subr.mxu0 0.0
  %787 = vmatpush1.msra.mxu0 0.0
  %788 = vmatprep.subr.mxu0 0.0
  %789 = vmatpush1.msra.mxu0 0.0
  %790 = vmatprep.subr.mxu0 0.0
  %791 = vmatpush1.msra.mxu0 0.0
  %792 = vmatprep.subr.mxu0 0.0
  %793 = vmatpush1.msra.mxu0 0.0
  %794 = vmatprep.mubr.f32.mxu0 0.0
  %795 = vmatmul.mubr.f32.gmra.mrb[0].mxu0 %v725
  %v796 = vpop.f32.mrb[0].mxu0
  %v797 = vadd.f32 0.0, %v796
  %v798 = vpop.f32.mrb[0].mxu0
  %799 = vdwg.mxu0
  %v800 = vadd.f32 %v729, %v797
  %v801 = vtanh.pop %v800
  %s802 = scalar_lea.vmem [#allocation3], 56
  %803 = vst [vmem:[%s802] sm:$0xff] %v801
  %v804 = vld [vmem:[%s4] sm:$0xff]
  %v805 = vld [vmem:[%s4 + $0x8] sm:$0xff]
  %v806 = vld [vmem:[%s4 + $0x10] sm:$0xff]
  %v807 = vld [vmem:[%s4 + $0x18] sm:$0xff]
  %v808 = vld [vmem:[%s4 + $0x20] sm:$0xff]
  %v809 = vld [vmem:[%s4 + $0x28] sm:$0xff]
  %v810 = vld [vmem:[%s4 + $0x30] sm:$0xff]
  %v811 = vld [vmem:[%s4 + $0x38] sm:$0xff]
  %v812 = vld [vmem:[%s4 + $0x40] sm:$0xff]
  %v813 = vld [vmem:[%s4 + $0x48] sm:$0xff]
  %v814 = vld [vmem:[%s4 + $0x50] sm:$0xff]
  %v815 = vld [vmem:[%s4 + $0x58] sm:$0xff]
  %v816 = vld [vmem:[%s4 + $0x60] sm:$0xff]
  %v817 = vld [vmem:[%s4 + $0x68] sm:$0xff]
  %v818 = vld [vmem:[%s4 + $0x70] sm:$0xff]
  %v819 = vld [vmem:[%s4 + $0x78] sm:$0xff]
  %v820 = vld [vmem:[%s5] sm:$0xff]
  %v821 = vld [vmem:[%s5 + $0x8] sm:$0xff]
  %v822 = vld [vmem:[%s5 + $0x10] sm:$0xff]
  %v823 = vld [vmem:[%s5 + $0x18] sm:$0xff]
  %v824 = vld [vmem:[%s5 + $0x20] sm:$0xff]
  %v825 = vld [vmem:[%s5 + $0x28] sm:$0xff]
  %v826 = vld [vmem:[%s5 + $0x30] sm:$0xff]
  %v827 = vld [vmem:[%s5 + $0x38] sm:$0xff]
  %v828 = vld [vmem:[%s5 + $0x40] sm:$0xff]
  %v829 = vld [vmem:[%s5 + $0x48] sm:$0xff]
  %v830 = vld [vmem:[%s5 + $0x50] sm:$0xff]
  %v831 = vld [vmem:[%s5 + $0x58] sm:$0xff]
  %v832 = vld [vmem:[%s5 + $0x60] sm:$0xff]
  %v833 = vld [vmem:[%s5 + $0x68] sm:$0xff]
  %v834 = vld [vmem:[%s5 + $0x70] sm:$0xff]
  %v835 = vld [vmem:[%s5 + $0x78] sm:$0xff]
  %v836 = vld [vmem:[%s6] sm:$0x1]
  %v837 = vld [vmem:[#allocation3] sm:$0xff]
  %v838 = vld [vmem:[#allocation3 + $0x8] sm:$0xff]
  %v839 = vld [vmem:[#allocation3 + $0x10] sm:$0xff]
  %v840 = vld [vmem:[#allocation3 + $0x18] sm:$0xff]
  %v841 = vld [vmem:[#allocation3 + $0x20] sm:$0xff]
  %v842 = vld [vmem:[#allocation3 + $0x28] sm:$0xff]
  %v843 = vld [vmem:[#allocation3 + $0x30] sm:$0xff]
  %v844 = vld [vmem:[#allocation3 + $0x38] sm:$0xff]
  %v846 = vlaneseq
  %v847 = vshrl.u32 %v846, 7
  %v848 = vsub.s32 0, %v847
  %v849 = vrot.slane %v836, %v848
  %851 = vmatprep.subr.mxu0 0.0
  %852 = vmatpush1.msra.mxu0 %v804
  %853 = vmatprep.subr.mxu0 0.0
  %854 = vmatpush1.msra.mxu0 %v805
  %855 = vmatprep.subr.mxu0 0.0
  %856 = vmatpush1.msra.mxu0 %v806
  %857 = vmatprep.subr.mxu0 0.0
  %858 = vmatpush1.msra.mxu0 %v807
  %859 = vmatprep.subr.mxu0 0.0
  %860 = vmatpush1.msra.mxu0 %v808
  %861 = vmatprep.subr.mxu0 0.0
  %862 = vmatpush1.msra.mxu0 %v809
  %863 = vmatprep.subr.mxu0 0.0
  %864 = vmatpush1.msra.mxu0 %v810
  %865 = vmatprep.subr.mxu0 0.0
  %866 = vmatpush1.msra.mxu0 %v811
  %867 = vmatprep.subr.mxu0 0.0
  %868 = vmatpush1.msra.mxu0 %v812
  %869 = vmatprep.subr.mxu0 0.0
  %870 = vmatpush1.msra.mxu0 %v813
  %871 = vmatprep.subr.mxu0 0.0
  %872 = vmatpush1.msra.mxu0 %v814
  %873 = vmatprep.subr.mxu0 0.0
  %874 = vmatpush1.msra.mxu0 %v815
  %875 = vmatprep.subr.mxu0 0.0
  %876 = vmatpush1.msra.mxu0 %v816
  %877 = vmatprep.subr.mxu0 0.0
  %878 = vmatpush1.msra.mxu0 %v817
  %879 = vmatprep.subr.mxu0 0.0
  %880 = vmatpush1.msra.mxu0 %v818
  %881 = vmatprep.subr.mxu0 0.0
  %882 = vmatpush1.msra.mxu0 %v819
  %883 = vmatprep.subr.mxu0 0.0
  %884 = vmatpush1.msra.mxu0 0.0
  %885 = vmatprep.subr.mxu0 0.0
  %886 = vmatpush1.msra.mxu0 0.0
  %887 = vmatprep.subr.mxu0 0.0
  %888 = vmatpush1.msra.mxu0 0.0
  %889 = vmatprep.subr.mxu0 0.0
  %890 = vmatpush1.msra.mxu0 0.0
  %891 = vmatprep.subr.mxu0 0.0
  %892 = vmatpush1.msra.mxu0 0.0
  %893 = vmatprep.subr.mxu0 0.0
  %894 = vmatpush1.msra.mxu0 0.0
  %895 = vmatprep.subr.mxu0 0.0
  %896 = vmatpush1.msra.mxu0 0.0
  %897 = vmatprep.subr.mxu0 0.0
  %898 = vmatpush1.msra.mxu0 0.0
  %899 = vmatprep.subr.mxu0 0.0
  %900 = vmatpush1.msra.mxu0 0.0
  %901 = vmatprep.subr.mxu0 0.0
  %902 = vmatpush1.msra.mxu0 0.0
  %903 = vmatprep.subr.mxu0 0.0
  %904 = vmatpush1.msra.mxu0 0.0
  %905 = vmatprep.subr.mxu0 0.0
  %906 = vmatpush1.msra.mxu0 0.0
  %907 = vmatprep.subr.mxu0 0.0
  %908 = vmatpush1.msra.mxu0 0.0
  %909 = vmatprep.subr.mxu0 0.0
  %910 = vmatpush1.msra.mxu0 0.0
  %911 = vmatprep.subr.mxu0 0.0
  %912 = vmatpush1.msra.mxu0 0.0
  %913 = vmatprep.subr.mxu0 0.0
  %914 = vmatpush1.msra.mxu0 0.0
  %915 = vmatprep.mubr.f32.mxu0 0.0
  %916 = vmatmul.mubr.f32.gmra.mrb[0].mxu0 %v837
  %v917 = vpop.f32.mrb[0].mxu0
  %v918 = vadd.f32 %v849, %v917
  %v919 = vpop.f32.mrb[0].mxu0
  %920 = vmatprep.mubr.f32.mxu0 0.0
  %921 = vmatmul.mubr.f32.gmra.mrb[0].mxu0 %v838
  %v922 = vpop.f32.mrb[0].mxu0
  %v923 = vadd.f32 %v849, %v922
  %v924 = vpop.f32.mrb[0].mxu0
  %925 = vmatprep.mubr.f32.mxu0 0.0
  %926 = vmatmul.mubr.f32.gmra.mrb[0].mxu0 %v839
  %v927 = vpop.f32.mrb[0].mxu0
  %v928 = vadd.f32 %v849, %v927
  %v929 = vpop.f32.mrb[0].mxu0
  %930 = vmatprep.mubr.f32.mxu0 0.0
  %931 = vmatmul.mubr.f32.gmra.mrb[0].mxu0 %v840
  %v932 = vpop.f32.mrb[0].mxu0
  %v933 = vadd.f32 %v849, %v932
  %v934 = vpop.f32.mrb[0].mxu0
  %935 = vmatprep.mubr.f32.mxu0 0.0
  %936 = vmatmul.mubr.f32.gmra.mrb[0].mxu0 %v841
  %v937 = vpop.f32.mrb[0].mxu0
  %v938 = vadd.f32 %v849, %v937
  %v939 = vpop.f32.mrb[0].mxu0
  %940 = vmatprep.mubr.f32.mxu0 0.0
  %941 = vmatmul.mubr.f32.gmra.mrb[0].mxu0 %v842
  %v942 = vpop.f32.mrb[0].mxu0
  %v943 = vadd.f32 %v849, %v942
  %v944 = vpop.f32.mrb[0].mxu0
  %945 = vmatprep.mubr.f32.mxu0 0.0
  %946 = vmatmul.mubr.f32.gmra.mrb[0].mxu0 %v843
  %v947 = vpop.f32.mrb[0].mxu0
  %v948 = vadd.f32 %v849, %v947
  %v949 = vpop.f32.mrb[0].mxu0
  %950 = vmatprep.mubr.f32.mxu0 0.0
  %951 = vmatmul.mubr.f32.gmra.mrb[0].mxu0 %v844
  %v952 = vpop.f32.mrb[0].mxu0
  %v953 = vadd.f32 %v849, %v952
  %v954 = vpop.f32.mrb[0].mxu0
  %955 = vdwg.mxu0
  %956 = vst [vmem:[#allocation2] sm:$0xff] %v918
  %957 = vst [vmem:[#allocation2 + $0x8] sm:$0xff] %v923
  %958 = vst [vmem:[#allocation2 + $0x10] sm:$0xff] %v928
  %959 = vst [vmem:[#allocation2 + $0x18] sm:$0xff] %v933
  %960 = vst [vmem:[#allocation2 + $0x20] sm:$0xff] %v938
  %961 = vst [vmem:[#allocation2 + $0x28] sm:$0xff] %v943
  %962 = vst [vmem:[#allocation2 + $0x30] sm:$0xff] %v948
  %963 = vst [vmem:[#allocation2 + $0x38] sm:$0xff] %v953
  %v964 = vld [vmem:[#allocation2] sm:$0xff]
  %965 = vmatprep.subr.mxu0 0.0
  %966 = vmatpush1.msra.mxu0 %v820
  %967 = vmatprep.subr.mxu0 0.0
  %968 = vmatpush1.msra.mxu0 %v821
  %969 = vmatprep.subr.mxu0 0.0
  %970 = vmatpush1.msra.mxu0 %v822
  %971 = vmatprep.subr.mxu0 0.0
  %972 = vmatpush1.msra.mxu0 %v823
  %973 = vmatprep.subr.mxu0 0.0
  %974 = vmatpush1.msra.mxu0 %v824
  %975 = vmatprep.subr.mxu0 0.0
  %976 = vmatpush1.msra.mxu0 %v825
  %977 = vmatprep.subr.mxu0 0.0
  %978 = vmatpush1.msra.mxu0 %v826
  %979 = vmatprep.subr.mxu0 0.0
  %980 = vmatpush1.msra.mxu0 %v827
  %981 = vmatprep.subr.mxu0 0.0
  %982 = vmatpush1.msra.mxu0 %v828
  %983 = vmatprep.subr.mxu0 0.0
  %984 = vmatpush1.msra.mxu0 %v829
  %985 = vmatprep.subr.mxu0 0.0
  %986 = vmatpush1.msra.mxu0 %v830
  %987 = vmatprep.subr.mxu0 0.0
  %988 = vmatpush1.msra.mxu0 %v831
  %989 = vmatprep.subr.mxu0 0.0
  %990 = vmatpush1.msra.mxu0 %v832
  %991 = vmatprep.subr.mxu0 0.0
  %992 = vmatpush1.msra.mxu0 %v833
  %993 = vmatprep.subr.mxu0 0.0
  %994 = vmatpush1.msra.mxu0 %v834
  %995 = vmatprep.subr.mxu0 0.0
  %996 = vmatpush1.msra.mxu0 %v835
  %997 = vmatprep.subr.mxu0 0.0
  %998 = vmatpush1.msra.mxu0 0.0
  %999 = vmatprep.subr.mxu0 0.0
  %1000 = vmatpush1.msra.mxu0 0.0
  %1001 = vmatprep.subr.mxu0 0.0
  %1002 = vmatpush1.msra.mxu0 0.0
  %1003 = vmatprep.subr.mxu0 0.0
  %1004 = vmatpush1.msra.mxu0 0.0
  %1005 = vmatprep.subr.mxu0 0.0
  %1006 = vmatpush1.msra.mxu0 0.0
  %1007 = vmatprep.subr.mxu0 0.0
  %1008 = vmatpush1.msra.mxu0 0.0
  %1009 = vmatprep.subr.mxu0 0.0
  %1010 = vmatpush1.msra.mxu0 0.0
  %1011 = vmatprep.subr.mxu0 0.0
  %1012 = vmatpush1.msra.mxu0 0.0
  %1013 = vmatprep.subr.mxu0 0.0
  %1014 = vmatpush1.msra.mxu0 0.0
  %1015 = vmatprep.subr.mxu0 0.0
  %1016 = vmatpush1.msra.mxu0 0.0
  %1017 = vmatprep.subr.mxu0 0.0
  %1018 = vmatpush1.msra.mxu0 0.0
  %1019 = vmatprep.subr.mxu0 0.0
  %1020 = vmatpush1.msra.mxu0 0.0
  %1021 = vmatprep.subr.mxu0 0.0
  %1022 = vmatpush1.msra.mxu0 0.0
  %1023 = vmatprep.subr.mxu0 0.0
  %1024 = vmatpush1.msra.mxu0 0.0
  %1025 = vmatprep.subr.mxu0 0.0
  %1026 = vmatpush1.msra.mxu0 0.0
  %1027 = vmatprep.subr.mxu0 0.0
  %1028 = vmatpush1.msra.mxu0 0.0
  %1029 = vmatprep.mubr.f32.mxu0 0.0
  %1030 = vmatmul.mubr.f32.gmra.mrb[0].mxu0 0.0
  %v1031 = vpop.f32.mrb[0].mxu0
  %v1032 = vadd.f32 0.0, %v1031
  %v1033 = vpop.f32.mrb[0].mxu0
  %1034 = vdwg.mxu0
  %v1035 = vadd.f32 %v964, %v1032
  %v1036 = vtanh.pop %v1035
  %v1037 = vld [vmem:[%s272] sm:$0xff]
  %1038 = vmatprep.subr.mxu0 0.0
  %1039 = vmatpush1.msra.mxu0 %v820
  %1040 = vmatprep.subr.mxu0 0.0
  %1041 = vmatpush1.msra.mxu0 %v821
  %1042 = vmatprep.subr.mxu0 0.0
  %1043 = vmatpush1.msra.mxu0 %v822
  %1044 = vmatprep.subr.mxu0 0.0
  %1045 = vmatpush1.msra.mxu0 %v823
  %1046 = vmatprep.subr.mxu0 0.0
  %1047 = vmatpush1.msra.mxu0 %v824
  %1048 = vmatprep.subr.mxu0 0.0
  %1049 = vmatpush1.msra.mxu0 %v825
  %1050 = vmatprep.subr.mxu0 0.0
  %1051 = vmatpush1.msra.mxu0 %v826
  %1052 = vmatprep.subr.mxu0 0.0
  %1053 = vmatpush1.msra.mxu0 %v827
  %1054 = vmatprep.subr.mxu0 0.0
  %1055 = vmatpush1.msra.mxu0 %v828
  %1056 = vmatprep.subr.mxu0 0.0
  %1057 = vmatpush1.msra.mxu0 %v829
  %1058 = vmatprep.subr.mxu0 0.0
  %1059 = vmatpush1.msra.mxu0 %v830
  %1060 = vmatprep.subr.mxu0 0.0
  %1061 = vmatpush1.msra.mxu0 %v831
  %1062 = vmatprep.subr.mxu0 0.0
  %1063 = vmatpush1.msra.mxu0 %v832
  %1064 = vmatprep.subr.mxu0 0.0
  %1065 = vmatpush1.msra.mxu0 %v833
  %1066 = vmatprep.subr.mxu0 0.0
  %1067 = vmatpush1.msra.mxu0 %v834
  %1068 = vmatprep.subr.mxu0 0.0
  %1069 = vmatpush1.msra.mxu0 %v835
  %1070 = vmatprep.subr.mxu0 0.0
  %1071 = vmatpush1.msra.mxu0 0.0
  %1072 = vmatprep.subr.mxu0 0.0
  %1073 = vmatpush1.msra.mxu0 0.0
  %1074 = vmatprep.subr.mxu0 0.0
  %1075 = vmatpush1.msra.mxu0 0.0
  %1076 = vmatprep.subr.mxu0 0.0
  %1077 = vmatpush1.msra.mxu0 0.0
  %1078 = vmatprep.subr.mxu0 0.0
  %1079 = vmatpush1.msra.mxu0 0.0
  %1080 = vmatprep.subr.mxu0 0.0
  %1081 = vmatpush1.msra.mxu0 0.0
  %1082 = vmatprep.subr.mxu0 0.0
  %1083 = vmatpush1.msra.mxu0 0.0
  %1084 = vmatprep.subr.mxu0 0.0
  %1085 = vmatpush1.msra.mxu0 0.0
  %1086 = vmatprep.subr.mxu0 0.0
  %1087 = vmatpush1.msra.mxu0 0.0
  %1088 = vmatprep.subr.mxu0 0.0
  %1089 = vmatpush1.msra.mxu0 0.0
  %1090 = vmatprep.subr.mxu0 0.0
  %1091 = vmatpush1.msra.mxu0 0.0
  %1092 = vmatprep.subr.mxu0 0.0
  %1093 = vmatpush1.msra.mxu0 0.0
  %1094 = vmatprep.subr.mxu0 0.0
  %1095 = vmatpush1.msra.mxu0 0.0
  %1096 = vmatprep.subr.mxu0 0.0
  %1097 = vmatpush1.msra.mxu0 0.0
  %1098 = vmatprep.subr.mxu0 0.0
  %1099 = vmatpush1.msra.mxu0 0.0
  %1100 = vmatprep.subr.mxu0 0.0
  %1101 = vmatpush1.msra.mxu0 0.0
  %1102 = vmatprep.mubr.f32.mxu0 0.0
  %1103 = vmatmul.mubr.f32.gmra.mrb[0].mxu0 %v1036
  %v1104 = vpop.f32.mrb[0].mxu0
  %v1105 = vadd.f32 0.0, %v1104
  %v1106 = vpop.f32.mrb[0].mxu0
  %1107 = vdwg.mxu0
  %v1108 = vadd.f32 %v1037, %v1105
  %v1109 = vtanh.pop %v1108
  %v1110 = vld [vmem:[%s348] sm:$0xff]
  %1111 = vmatprep.subr.mxu0 0.0
  %1112 = vmatpush1.msra.mxu0 %v820
  %1113 = vmatprep.subr.mxu0 0.0
  %1114 = vmatpush1.msra.mxu0 %v821
  %1115 = vmatprep.subr.mxu0 0.0
  %1116 = vmatpush1.msra.mxu0 %v822
  %1117 = vmatprep.subr.mxu0 0.0
  %1118 = vmatpush1.msra.mxu0 %v823
  %1119 = vmatprep.subr.mxu0 0.0
  %1120 = vmatpush1.msra.mxu0 %v824
  %1121 = vmatprep.subr.mxu0 0.0
  %1122 = vmatpush1.msra.mxu0 %v825
  %1123 = vmatprep.subr.mxu0 0.0
  %1124 = vmatpush1.msra.mxu0 %v826
  %1125 = vmatprep.subr.mxu0 0.0
  %1126 = vmatpush1.msra.mxu0 %v827
  %1127 = vmatprep.subr.mxu0 0.0
  %1128 = vmatpush1.msra.mxu0 %v828
  %1129 = vmatprep.subr.mxu0 0.0
  %1130 = vmatpush1.msra.mxu0 %v829
  %1131 = vmatprep.subr.mxu0 0.0
  %1132 = vmatpush1.msra.mxu0 %v830
  %1133 = vmatprep.subr.mxu0 0.0
  %1134 = vmatpush1.msra.mxu0 %v831
  %1135 = vmatprep.subr.mxu0 0.0
  %1136 = vmatpush1.msra.mxu0 %v832
  %1137 = vmatprep.subr.mxu0 0.0
  %1138 = vmatpush1.msra.mxu0 %v833
  %1139 = vmatprep.subr.mxu0 0.0
  %1140 = vmatpush1.msra.mxu0 %v834
  %1141 = vmatprep.subr.mxu0 0.0
  %1142 = vmatpush1.msra.mxu0 %v835
  %1143 = vmatprep.subr.mxu0 0.0
  %1144 = vmatpush1.msra.mxu0 0.0
  %1145 = vmatprep.subr.mxu0 0.0
  %1146 = vmatpush1.msra.mxu0 0.0
  %1147 = vmatprep.subr.mxu0 0.0
  %1148 = vmatpush1.msra.mxu0 0.0
  %1149 = vmatprep.subr.mxu0 0.0
  %1150 = vmatpush1.msra.mxu0 0.0
  %1151 = vmatprep.subr.mxu0 0.0
  %1152 = vmatpush1.msra.mxu0 0.0
  %1153 = vmatprep.subr.mxu0 0.0
  %1154 = vmatpush1.msra.mxu0 0.0
  %1155 = vmatprep.subr.mxu0 0.0
  %1156 = vmatpush1.msra.mxu0 0.0
  %1157 = vmatprep.subr.mxu0 0.0
  %1158 = vmatpush1.msra.mxu0 0.0
  %1159 = vmatprep.subr.mxu0 0.0
  %1160 = vmatpush1.msra.mxu0 0.0
  %1161 = vmatprep.subr.mxu0 0.0
  %1162 = vmatpush1.msra.mxu0 0.0
  %1163 = vmatprep.subr.mxu0 0.0
  %1164 = vmatpush1.msra.mxu0 0.0
  %1165 = vmatprep.subr.mxu0 0.0
  %1166 = vmatpush1.msra.mxu0 0.0
  %1167 = vmatprep.subr.mxu0 0.0
  %1168 = vmatpush1.msra.mxu0 0.0
  %1169 = vmatprep.subr.mxu0 0.0
  %1170 = vmatpush1.msra.mxu0 0.0
  %1171 = vmatprep.subr.mxu0 0.0
  %1172 = vmatpush1.msra.mxu0 0.0
  %1173 = vmatprep.subr.mxu0 0.0
  %1174 = vmatpush1.msra.mxu0 0.0
  %1175 = vmatprep.mubr.f32.mxu0 0.0
  %1176 = vmatmul.mubr.f32.gmra.mrb[0].mxu0 %v1109
  %v1177 = vpop.f32.mrb[0].mxu0
  %v1178 = vadd.f32 0.0, %v1177
  %v1179 = vpop.f32.mrb[0].mxu0
  %1180 = vdwg.mxu0
  %v1181 = vadd.f32 %v1110, %v1178
  %v1182 = vtanh.pop %v1181
  %v1183 = vld [vmem:[%s424] sm:$0xff]
  %1184 = vmatprep.subr.mxu0 0.0
  %1185 = vmatpush1.msra.mxu0 %v820
  %1186 = vmatprep.subr.mxu0 0.0
  %1187 = vmatpush1.msra.mxu0 %v821
  %1188 = vmatprep.subr.mxu0 0.0
  %1189 = vmatpush1.msra.mxu0 %v822
  %1190 = vmatprep.subr.mxu0 0.0
  %1191 = vmatpush1.msra.mxu0 %v823
  %1192 = vmatprep.subr.mxu0 0.0
  %1193 = vmatpush1.msra.mxu0 %v824
  %1194 = vmatprep.subr.mxu0 0.0
  %1195 = vmatpush1.msra.mxu0 %v825
  %1196 = vmatprep.subr.mxu0 0.0
  %1197 = vmatpush1.msra.mxu0 %v826
  %1198 = vmatprep.subr.mxu0 0.0
  %1199 = vmatpush1.msra.mxu0 %v827
  %1200 = vmatprep.subr.mxu0 0.0
  %1201 = vmatpush1.msra.mxu0 %v828
  %1202 = vmatprep.subr.mxu0 0.0
  %1203 = vmatpush1.msra.mxu0 %v829
  %1204 = vmatprep.subr.mxu0 0.0
  %1205 = vmatpush1.msra.mxu0 %v830
  %1206 = vmatprep.subr.mxu0 0.0
  %1207 = vmatpush1.msra.mxu0 %v831
  %1208 = vmatprep.subr.mxu0 0.0
  %1209 = vmatpush1.msra.mxu0 %v832
  %1210 = vmatprep.subr.mxu0 0.0
  %1211 = vmatpush1.msra.mxu0 %v833
  %1212 = vmatprep.subr.mxu0 0.0
  %1213 = vmatpush1.msra.mxu0 %v834
  %1214 = vmatprep.subr.mxu0 0.0
  %1215 = vmatpush1.msra.mxu0 %v835
  %1216 = vmatprep.subr.mxu0 0.0
  %1217 = vmatpush1.msra.mxu0 0.0
  %1218 = vmatprep.subr.mxu0 0.0
  %1219 = vmatpush1.msra.mxu0 0.0
  %1220 = vmatprep.subr.mxu0 0.0
  %1221 = vmatpush1.msra.mxu0 0.0
  %1222 = vmatprep.subr.mxu0 0.0
  %1223 = vmatpush1.msra.mxu0 0.0
  %1224 = vmatprep.subr.mxu0 0.0
  %1225 = vmatpush1.msra.mxu0 0.0
  %1226 = vmatprep.subr.mxu0 0.0
  %1227 = vmatpush1.msra.mxu0 0.0
  %1228 = vmatprep.subr.mxu0 0.0
  %1229 = vmatpush1.msra.mxu0 0.0
  %1230 = vmatprep.subr.mxu0 0.0
  %1231 = vmatpush1.msra.mxu0 0.0
  %1232 = vmatprep.subr.mxu0 0.0
  %1233 = vmatpush1.msra.mxu0 0.0
  %1234 = vmatprep.subr.mxu0 0.0
  %1235 = vmatpush1.msra.mxu0 0.0
  %1236 = vmatprep.subr.mxu0 0.0
  %1237 = vmatpush1.msra.mxu0 0.0
  %1238 = vmatprep.subr.mxu0 0.0
  %1239 = vmatpush1.msra.mxu0 0.0
  %1240 = vmatprep.subr.mxu0 0.0
  %1241 = vmatpush1.msra.mxu0 0.0
  %1242 = vmatprep.subr.mxu0 0.0
  %1243 = vmatpush1.msra.mxu0 0.0
  %1244 = vmatprep.subr.mxu0 0.0
  %1245 = vmatpush1.msra.mxu0 0.0
  %1246 = vmatprep.subr.mxu0 0.0
  %1247 = vmatpush1.msra.mxu0 0.0
  %1248 = vmatprep.mubr.f32.mxu0 0.0
  %1249 = vmatmul.mubr.f32.gmra.mrb[0].mxu0 %v1182
  %v1250 = vpop.f32.mrb[0].mxu0
  %v1251 = vadd.f32 0.0, %v1250
  %v1252 = vpop.f32.mrb[0].mxu0
  %1253 = vdwg.mxu0
  %v1254 = vadd.f32 %v1183, %v1251
  %v1255 = vtanh.pop %v1254
  %v1256 = vld [vmem:[%s500] sm:$0xff]
  %1257 = vmatprep.subr.mxu0 0.0
  %1258 = vmatpush1.msra.mxu0 %v820
  %1259 = vmatprep.subr.mxu0 0.0
  %1260 = vmatpush1.msra.mxu0 %v821
  %1261 = vmatprep.subr.mxu0 0.0
  %1262 = vmatpush1.msra.mxu0 %v822
  %1263 = vmatprep.subr.mxu0 0.0
  %1264 = vmatpush1.msra.mxu0 %v823
  %1265 = vmatprep.subr.mxu0 0.0
  %1266 = vmatpush1.msra.mxu0 %v824
  %1267 = vmatprep.subr.mxu0 0.0
  %1268 = vmatpush1.msra.mxu0 %v825
  %1269 = vmatprep.subr.mxu0 0.0
  %1270 = vmatpush1.msra.mxu0 %v826
  %1271 = vmatprep.subr.mxu0 0.0
  %1272 = vmatpush1.msra.mxu0 %v827
  %1273 = vmatprep.subr.mxu0 0.0
  %1274 = vmatpush1.msra.mxu0 %v828
  %1275 = vmatprep.subr.mxu0 0.0
  %1276 = vmatpush1.msra.mxu0 %v829
  %1277 = vmatprep.subr.mxu0 0.0
  %1278 = vmatpush1.msra.mxu0 %v830
  %1279 = vmatprep.subr.mxu0 0.0
  %1280 = vmatpush1.msra.mxu0 %v831
  %1281 = vmatprep.subr.mxu0 0.0
  %1282 = vmatpush1.msra.mxu0 %v832
  %1283 = vmatprep.subr.mxu0 0.0
  %1284 = vmatpush1.msra.mxu0 %v833
  %1285 = vmatprep.subr.mxu0 0.0
  %1286 = vmatpush1.msra.mxu0 %v834
  %1287 = vmatprep.subr.mxu0 0.0
  %1288 = vmatpush1.msra.mxu0 %v835
  %1289 = vmatprep.subr.mxu0 0.0
  %1290 = vmatpush1.msra.mxu0 0.0
  %1291 = vmatprep.subr.mxu0 0.0
  %1292 = vmatpush1.msra.mxu0 0.0
  %1293 = vmatprep.subr.mxu0 0.0
  %1294 = vmatpush1.msra.mxu0 0.0
  %1295 = vmatprep.subr.mxu0 0.0
  %1296 = vmatpush1.msra.mxu0 0.0
  %1297 = vmatprep.subr.mxu0 0.0
  %1298 = vmatpush1.msra.mxu0 0.0
  %1299 = vmatprep.subr.mxu0 0.0
  %1300 = vmatpush1.msra.mxu0 0.0
  %1301 = vmatprep.subr.mxu0 0.0
  %1302 = vmatpush1.msra.mxu0 0.0
  %1303 = vmatprep.subr.mxu0 0.0
  %1304 = vmatpush1.msra.mxu0 0.0
  %1305 = vmatprep.subr.mxu0 0.0
  %1306 = vmatpush1.msra.mxu0 0.0
  %1307 = vmatprep.subr.mxu0 0.0
  %1308 = vmatpush1.msra.mxu0 0.0
  %1309 = vmatprep.subr.mxu0 0.0
  %1310 = vmatpush1.msra.mxu0 0.0
  %1311 = vmatprep.subr.mxu0 0.0
  %1312 = vmatpush1.msra.mxu0 0.0
  %1313 = vmatprep.subr.mxu0 0.0
  %1314 = vmatpush1.msra.mxu0 0.0
  %1315 = vmatprep.subr.mxu0 0.0
  %1316 = vmatpush1.msra.mxu0 0.0
  %1317 = vmatprep.subr.mxu0 0.0
  %1318 = vmatpush1.msra.mxu0 0.0
  %1319 = vmatprep.subr.mxu0 0.0
  %1320 = vmatpush1.msra.mxu0 0.0
  %1321 = vmatprep.mubr.f32.mxu0 0.0
  %1322 = vmatmul.mubr.f32.gmra.mrb[0].mxu0 %v1255
  %v1323 = vpop.f32.mrb[0].mxu0
  %v1324 = vadd.f32 0.0, %v1323
  %v1325 = vpop.f32.mrb[0].mxu0
  %1326 = vdwg.mxu0
  %v1327 = vadd.f32 %v1256, %v1324
  %v1328 = vtanh.pop %v1327
  %v1329 = vld [vmem:[%s576] sm:$0xff]
  %1330 = vmatprep.subr.mxu0 0.0
  %1331 = vmatpush1.msra.mxu0 %v820
  %1332 = vmatprep.subr.mxu0 0.0
  %1333 = vmatpush1.msra.mxu0 %v821
  %1334 = vmatprep.subr.mxu0 0.0
  %1335 = vmatpush1.msra.mxu0 %v822
  %1336 = vmatprep.subr.mxu0 0.0
  %1337 = vmatpush1.msra.mxu0 %v823
  %1338 = vmatprep.subr.mxu0 0.0
  %1339 = vmatpush1.msra.mxu0 %v824
  %1340 = vmatprep.subr.mxu0 0.0
  %1341 = vmatpush1.msra.mxu0 %v825
  %1342 = vmatprep.subr.mxu0 0.0
  %1343 = vmatpush1.msra.mxu0 %v826
  %1344 = vmatprep.subr.mxu0 0.0
  %1345 = vmatpush1.msra.mxu0 %v827
  %1346 = vmatprep.subr.mxu0 0.0
  %1347 = vmatpush1.msra.mxu0 %v828
  %1348 = vmatprep.subr.mxu0 0.0
  %1349 = vmatpush1.msra.mxu0 %v829
  %1350 = vmatprep.subr.mxu0 0.0
  %1351 = vmatpush1.msra.mxu0 %v830
  %1352 = vmatprep.subr.mxu0 0.0
  %1353 = vmatpush1.msra.mxu0 %v831
  %1354 = vmatprep.subr.mxu0 0.0
  %1355 = vmatpush1.msra.mxu0 %v832
  %1356 = vmatprep.subr.mxu0 0.0
  %1357 = vmatpush1.msra.mxu0 %v833
  %1358 = vmatprep.subr.mxu0 0.0
  %1359 = vmatpush1.msra.mxu0 %v834
  %1360 = vmatprep.subr.mxu0 0.0
  %1361 = vmatpush1.msra.mxu0 %v835
  %1362 = vmatprep.subr.mxu0 0.0
  %1363 = vmatpush1.msra.mxu0 0.0
  %1364 = vmatprep.subr.mxu0 0.0
  %1365 = vmatpush1.msra.mxu0 0.0
  %1366 = vmatprep.subr.mxu0 0.0
  %1367 = vmatpush1.msra.mxu0 0.0
  %1368 = vmatprep.subr.mxu0 0.0
  %1369 = vmatpush1.msra.mxu0 0.0
  %1370 = vmatprep.subr.mxu0 0.0
  %1371 = vmatpush1.msra.mxu0 0.0
  %1372 = vmatprep.subr.mxu0 0.0
  %1373 = vmatpush1.msra.mxu0 0.0
  %1374 = vmatprep.subr.mxu0 0.0
  %1375 = vmatpush1.msra.mxu0 0.0
  %1376 = vmatprep.subr.mxu0 0.0
  %1377 = vmatpush1.msra.mxu0 0.0
  %1378 = vmatprep.subr.mxu0 0.0
  %1379 = vmatpush1.msra.mxu0 0.0
  %1380 = vmatprep.subr.mxu0 0.0
  %1381 = vmatpush1.msra.mxu0 0.0
  %1382 = vmatprep.subr.mxu0 0.0
  %1383 = vmatpush1.msra.mxu0 0.0
  %1384 = vmatprep.subr.mxu0 0.0
  %1385 = vmatpush1.msra.mxu0 0.0
  %1386 = vmatprep.subr.mxu0 0.0
  %1387 = vmatpush1.msra.mxu0 0.0
  %1388 = vmatprep.subr.mxu0 0.0
  %1389 = vmatpush1.msra.mxu0 0.0
  %1390 = vmatprep.subr.mxu0 0.0
  %1391 = vmatpush1.msra.mxu0 0.0
  %1392 = vmatprep.subr.mxu0 0.0
  %1393 = vmatpush1.msra.mxu0 0.0
  %1394 = vmatprep.mubr.f32.mxu0 0.0
  %1395 = vmatmul.mubr.f32.gmra.mrb[0].mxu0 %v1328
  %v1396 = vpop.f32.mrb[0].mxu0
  %v1397 = vadd.f32 0.0, %v1396
  %v1398 = vpop.f32.mrb[0].mxu0
  %1399 = vdwg.mxu0
  %v1400 = vadd.f32 %v1329, %v1397
  %v1401 = vtanh.pop %v1400
  %v1402 = vld [vmem:[%s652] sm:$0xff]
  %1403 = vmatprep.subr.mxu0 0.0
  %1404 = vmatpush1.msra.mxu0 %v820
  %1405 = vmatprep.subr.mxu0 0.0
  %1406 = vmatpush1.msra.mxu0 %v821
  %1407 = vmatprep.subr.mxu0 0.0
  %1408 = vmatpush1.msra.mxu0 %v822
  %1409 = vmatprep.subr.mxu0 0.0
  %1410 = vmatpush1.msra.mxu0 %v823
  %1411 = vmatprep.subr.mxu0 0.0
  %1412 = vmatpush1.msra.mxu0 %v824
  %1413 = vmatprep.subr.mxu0 0.0
  %1414 = vmatpush1.msra.mxu0 %v825
  %1415 = vmatprep.subr.mxu0 0.0
  %1416 = vmatpush1.msra.mxu0 %v826
  %1417 = vmatprep.subr.mxu0 0.0
  %1418 = vmatpush1.msra.mxu0 %v827
  %1419 = vmatprep.subr.mxu0 0.0
  %1420 = vmatpush1.msra.mxu0 %v828
  %1421 = vmatprep.subr.mxu0 0.0
  %1422 = vmatpush1.msra.mxu0 %v829
  %1423 = vmatprep.subr.mxu0 0.0
  %1424 = vmatpush1.msra.mxu0 %v830
  %1425 = vmatprep.subr.mxu0 0.0
  %1426 = vmatpush1.msra.mxu0 %v831
  %1427 = vmatprep.subr.mxu0 0.0
  %1428 = vmatpush1.msra.mxu0 %v832
  %1429 = vmatprep.subr.mxu0 0.0
  %1430 = vmatpush1.msra.mxu0 %v833
  %1431 = vmatprep.subr.mxu0 0.0
  %1432 = vmatpush1.msra.mxu0 %v834
  %1433 = vmatprep.subr.mxu0 0.0
  %1434 = vmatpush1.msra.mxu0 %v835
  %1435 = vmatprep.subr.mxu0 0.0
  %1436 = vmatpush1.msra.mxu0 0.0
  %1437 = vmatprep.subr.mxu0 0.0
  %1438 = vmatpush1.msra.mxu0 0.0
  %1439 = vmatprep.subr.mxu0 0.0
  %1440 = vmatpush1.msra.mxu0 0.0
  %1441 = vmatprep.subr.mxu0 0.0
  %1442 = vmatpush1.msra.mxu0 0.0
  %1443 = vmatprep.subr.mxu0 0.0
  %1444 = vmatpush1.msra.mxu0 0.0
  %1445 = vmatprep.subr.mxu0 0.0
  %1446 = vmatpush1.msra.mxu0 0.0
  %1447 = vmatprep.subr.mxu0 0.0
  %1448 = vmatpush1.msra.mxu0 0.0
  %1449 = vmatprep.subr.mxu0 0.0
  %1450 = vmatpush1.msra.mxu0 0.0
  %1451 = vmatprep.subr.mxu0 0.0
  %1452 = vmatpush1.msra.mxu0 0.0
  %1453 = vmatprep.subr.mxu0 0.0
  %1454 = vmatpush1.msra.mxu0 0.0
  %1455 = vmatprep.subr.mxu0 0.0
  %1456 = vmatpush1.msra.mxu0 0.0
  %1457 = vmatprep.subr.mxu0 0.0
  %1458 = vmatpush1.msra.mxu0 0.0
  %1459 = vmatprep.subr.mxu0 0.0
  %1460 = vmatpush1.msra.mxu0 0.0
  %1461 = vmatprep.subr.mxu0 0.0
  %1462 = vmatpush1.msra.mxu0 0.0
  %1463 = vmatprep.subr.mxu0 0.0
  %1464 = vmatpush1.msra.mxu0 0.0
  %1465 = vmatprep.subr.mxu0 0.0
  %1466 = vmatpush1.msra.mxu0 0.0
  %1467 = vmatprep.mubr.f32.mxu0 0.0
  %1468 = vmatmul.mubr.f32.gmra.mrb[0].mxu0 %v1401
  %v1469 = vpop.f32.mrb[0].mxu0
  %v1470 = vadd.f32 0.0, %v1469
  %v1471 = vpop.f32.mrb[0].mxu0
  %1472 = vdwg.mxu0
  %v1473 = vadd.f32 %v1402, %v1470
  %v1474 = vtanh.pop %v1473
  %v1475 = vld [vmem:[%s728] sm:$0xff]
  %1476 = vmatprep.subr.mxu0 0.0
  %1477 = vmatpush1.msra.mxu0 %v820
  %1478 = vmatprep.subr.mxu0 0.0
  %1479 = vmatpush1.msra.mxu0 %v821
  %1480 = vmatprep.subr.mxu0 0.0
  %1481 = vmatpush1.msra.mxu0 %v822
  %1482 = vmatprep.subr.mxu0 0.0
  %1483 = vmatpush1.msra.mxu0 %v823
  %1484 = vmatprep.subr.mxu0 0.0
  %1485 = vmatpush1.msra.mxu0 %v824
  %1486 = vmatprep.subr.mxu0 0.0
  %1487 = vmatpush1.msra.mxu0 %v825
  %1488 = vmatprep.subr.mxu0 0.0
  %1489 = vmatpush1.msra.mxu0 %v826
  %1490 = vmatprep.subr.mxu0 0.0
  %1491 = vmatpush1.msra.mxu0 %v827
  %1492 = vmatprep.subr.mxu0 0.0
  %1493 = vmatpush1.msra.mxu0 %v828
  %1494 = vmatprep.subr.mxu0 0.0
  %1495 = vmatpush1.msra.mxu0 %v829
  %1496 = vmatprep.subr.mxu0 0.0
  %1497 = vmatpush1.msra.mxu0 %v830
  %1498 = vmatprep.subr.mxu0 0.0
  %1499 = vmatpush1.msra.mxu0 %v831
  %1500 = vmatprep.subr.mxu0 0.0
  %1501 = vmatpush1.msra.mxu0 %v832
  %1502 = vmatprep.subr.mxu0 0.0
  %1503 = vmatpush1.msra.mxu0 %v833
  %1504 = vmatprep.subr.mxu0 0.0
  %1505 = vmatpush1.msra.mxu0 %v834
  %1506 = vmatprep.subr.mxu0 0.0
  %1507 = vmatpush1.msra.mxu0 %v835
  %1508 = vmatprep.subr.mxu0 0.0
  %1509 = vmatpush1.msra.mxu0 0.0
  %1510 = vmatprep.subr.mxu0 0.0
  %1511 = vmatpush1.msra.mxu0 0.0
  %1512 = vmatprep.subr.mxu0 0.0
  %1513 = vmatpush1.msra.mxu0 0.0
  %1514 = vmatprep.subr.mxu0 0.0
  %1515 = vmatpush1.msra.mxu0 0.0
  %1516 = vmatprep.subr.mxu0 0.0
  %1517 = vmatpush1.msra.mxu0 0.0
  %1518 = vmatprep.subr.mxu0 0.0
  %1519 = vmatpush1.msra.mxu0 0.0
  %1520 = vmatprep.subr.mxu0 0.0
  %1521 = vmatpush1.msra.mxu0 0.0
  %1522 = vmatprep.subr.mxu0 0.0
  %1523 = vmatpush1.msra.mxu0 0.0
  %1524 = vmatprep.subr.mxu0 0.0
  %1525 = vmatpush1.msra.mxu0 0.0
  %1526 = vmatprep.subr.mxu0 0.0
  %1527 = vmatpush1.msra.mxu0 0.0
  %1528 = vmatprep.subr.mxu0 0.0
  %1529 = vmatpush1.msra.mxu0 0.0
  %1530 = vmatprep.subr.mxu0 0.0
  %1531 = vmatpush1.msra.mxu0 0.0
  %1532 = vmatprep.subr.mxu0 0.0
  %1533 = vmatpush1.msra.mxu0 0.0
  %1534 = vmatprep.subr.mxu0 0.0
  %1535 = vmatpush1.msra.mxu0 0.0
  %1536 = vmatprep.subr.mxu0 0.0
  %1537 = vmatpush1.msra.mxu0 0.0
  %1538 = vmatprep.subr.mxu0 0.0
  %1539 = vmatpush1.msra.mxu0 0.0
  %1540 = vmatprep.mubr.f32.mxu0 0.0
  %1541 = vmatmul.mubr.f32.gmra.mrb[0].mxu0 %v1474
  %v1542 = vpop.f32.mrb[0].mxu0
  %v1543 = vadd.f32 0.0, %v1542
  %v1544 = vpop.f32.mrb[0].mxu0
  %1545 = vdwg.mxu0
  %v1546 = vadd.f32 %v1475, %v1543
  %v1547 = vtanh.pop %v1546
  %v1548 = vlaneseq
  %v1549 = vand.u32 %v1548, 127
  %vm1550 = vcmp.lt.s32.totalorder %v1549, 32
  %v1551 = vsel %vm1550, 1, 0
  %v1552 = vcvt.s32.f32 %v1551
  %1553 = vadd.xlane.f32.xlu0 %v1547
  %v1554 = vpop.xlane.xlu0 %1553
  %v1555 = vmul.f32 %v1554, 0.03125
  %v1556 = vsub.f32 %v1547, %v1555
  %v1557 = vmul.f32 %v1556, %v1552
  %v1558 = vmul.f32 %v1557, %v1557
  %1559 = vadd.xlane.f32.xlu0 %v1558
  %v1560 = vpop.xlane.xlu0 %1559
  %v1561 = vmul.f32 %v1560, 0.03125
  %v1562 = vadd.f32 %v1561, 1e-05
  %v1563 = vrsqrt.pop %v1562
  %v1564 = vmul.f32 %v1557, %v1563
  %v1565 = vld [vmem:[%s7] sm:$0x1]
  %v1567 = vlaneseq
  %v1568 = vshrl.u32 %v1567, 7
  %v1569 = vsub.s32 0, %v1568
  %v1570 = vrot.slane %v1565, %v1569
  %v1572 = vmul.f32 %v1564, %v1570
  %v1573 = vld [vmem:[%s8] sm:$0x1]
  %v1575 = vlaneseq
  %v1576 = vshrl.u32 %v1575, 7
  %v1577 = vsub.s32 0, %v1576
  %v1578 = vrot.slane %v1573, %v1577
  %v1580 = vadd.f32 %v1572, %v1578
  %v1581 = vld [vmem:[%s9] sm:$0xff]
  %v1582 = vld [vmem:[%s9 + $0x8] sm:$0xff]
  %v1583 = vld [vmem:[%s9 + $0x10] sm:$0xff]
  %v1584 = vld [vmem:[%s9 + $0x18] sm:$0xff]
  %v1585 = vld [vmem:[%s9 + $0x20] sm:$0xff]
  %v1586 = vld [vmem:[%s9 + $0x28] sm:$0xff]
  %v1587 = vld [vmem:[%s9 + $0x30] sm:$0xff]
  %v1588 = vld [vmem:[%s9 + $0x38] sm:$0xff]
  %v1589 = vld [vmem:[%s9 + $0x40] sm:$0xff]
  %v1590 = vld [vmem:[%s9 + $0x48] sm:$0xff]
  %v1591 = vld [vmem:[%s9 + $0x50] sm:$0xff]
  %v1592 = vld [vmem:[%s9 + $0x58] sm:$0xff]
  %v1593 = vld [vmem:[%s9 + $0x60] sm:$0xff]
  %v1594 = vld [vmem:[%s9 + $0x68] sm:$0xff]
  %v1595 = vld [vmem:[%s9 + $0x70] sm:$0xff]
  %v1596 = vld [vmem:[%s9 + $0x78] sm:$0xff]
  %v1597 = vld [vmem:[%s10] sm:$0x1]
  %v1599 = vlaneseq
  %v1600 = vshrl.u32 %v1599, 7
  %v1601 = vsub.s32 0, %v1600
  %v1602 = vrot.slane %v1597, %v1601
  %1604 = vmatprep.subr.mxu0 0.0
  %1605 = vmatpush1.msra.mxu0 %v1581
  %1606 = vmatprep.subr.mxu0 0.0
  %1607 = vmatpush1.msra.mxu0 %v1582
  %1608 = vmatprep.subr.mxu0 0.0
  %1609 = vmatpush1.msra.mxu0 %v1583
  %1610 = vmatprep.subr.mxu0 0.0
  %1611 = vmatpush1.msra.mxu0 %v1584
  %1612 = vmatprep.subr.mxu0 0.0
  %1613 = vmatpush1.msra.mxu0 %v1585
  %1614 = vmatprep.subr.mxu0 0.0
  %1615 = vmatpush1.msra.mxu0 %v1586
  %1616 = vmatprep.subr.mxu0 0.0
  %1617 = vmatpush1.msra.mxu0 %v1587
  %1618 = vmatprep.subr.mxu0 0.0
  %1619 = vmatpush1.msra.mxu0 %v1588
  %1620 = vmatprep.subr.mxu0 0.0
  %1621 = vmatpush1.msra.mxu0 %v1589
  %1622 = vmatprep.subr.mxu0 0.0
  %1623 = vmatpush1.msra.mxu0 %v1590
  %1624 = vmatprep.subr.mxu0 0.0
  %1625 = vmatpush1.msra.mxu0 %v1591
  %1626 = vmatprep.subr.mxu0 0.0
  %1627 = vmatpush1.msra.mxu0 %v1592
  %1628 = vmatprep.subr.mxu0 0.0
  %1629 = vmatpush1.msra.mxu0 %v1593
  %1630 = vmatprep.subr.mxu0 0.0
  %1631 = vmatpush1.msra.mxu0 %v1594
  %1632 = vmatprep.subr.mxu0 0.0
  %1633 = vmatpush1.msra.mxu0 %v1595
  %1634 = vmatprep.subr.mxu0 0.0
  %1635 = vmatpush1.msra.mxu0 %v1596
  %1636 = vmatprep.subr.mxu0 0.0
  %1637 = vmatpush1.msra.mxu0 0.0
  %1638 = vmatprep.subr.mxu0 0.0
  %1639 = vmatpush1.msra.mxu0 0.0
  %1640 = vmatprep.subr.mxu0 0.0
  %1641 = vmatpush1.msra.mxu0 0.0
  %1642 = vmatprep.subr.mxu0 0.0
  %1643 = vmatpush1.msra.mxu0 0.0
  %1644 = vmatprep.subr.mxu0 0.0
  %1645 = vmatpush1.msra.mxu0 0.0
  %1646 = vmatprep.subr.mxu0 0.0
  %1647 = vmatpush1.msra.mxu0 0.0
  %1648 = vmatprep.subr.mxu0 0.0
  %1649 = vmatpush1.msra.mxu0 0.0
  %1650 = vmatprep.subr.mxu0 0.0
  %1651 = vmatpush1.msra.mxu0 0.0
  %1652 = vmatprep.subr.mxu0 0.0
  %1653 = vmatpush1.msra.mxu0 0.0
  %1654 = vmatprep.subr.mxu0 0.0
  %1655 = vmatpush1.msra.mxu0 0.0
  %1656 = vmatprep.subr.mxu0 0.0
  %1657 = vmatpush1.msra.mxu0 0.0
  %1658 = vmatprep.subr.mxu0 0.0
  %1659 = vmatpush1.msra.mxu0 0.0
  %1660 = vmatprep.subr.mxu0 0.0
  %1661 = vmatpush1.msra.mxu0 0.0
  %1662 = vmatprep.subr.mxu0 0.0
  %1663 = vmatpush1.msra.mxu0 0.0
  %1664 = vmatprep.subr.mxu0 0.0
  %1665 = vmatpush1.msra.mxu0 0.0
  %1666 = vmatprep.subr.mxu0 0.0
  %1667 = vmatpush1.msra.mxu0 0.0
  %1668 = vmatprep.mubr.f32.mxu0 0.0
  %1669 = vmatmul.mubr.f32.gmra.mrb[0].mxu0 %v1580
  %v1670 = vpop.f32.mrb[0].mxu0
  %v1671 = vadd.f32 %v1602, %v1670
  %v1672 = vpop.f32.mrb[0].mxu0
  %1673 = vdwg.mxu0
  %1674 = vst [vmem:[%s11] sm:$0xff] %v1671
  // Predicated region
  $region46: #{rnn_forward_pallas.1} parent=0 // pred_check
    _
  $region47: #{rnn_forward_pallas.1} parent=0 // pred_check_branch
    %1676 = sbr.rel (0) target = $region49
  $region48: #{rnn_forward_pallas.1} parent=0 // pred_region
    _
  $region49: #{rnn_forward_pallas.1} parent=0 // pred_fallthru
    _
  // Predicated region
  $region50: #{rnn_forward_pallas.1} parent=0 // pred_check
    _
  $region51: #{rnn_forward_pallas.1} parent=0 // pred_check_branch
    %1678 = sbr.rel (0) target = $region53
  $region52: #{rnn_forward_pallas.1} parent=0 // pred_region
    _
  $region53: #{rnn_forward_pallas.1} parent=0 // pred_fallthru
    _

</llo_original>
